<compile_context>
chip_gen: v5e
topology: v5e:2x2
jax: 0.10.0
libtpu: 0.0.40
codegen_flags: <defaults>
</compile_context>

<pallas_src>
import math
import jax
import jax.numpy as jnp
from jax import lax
from jax.experimental import pallas as pl
from jax.experimental.pallas import tpu as pltpu

_LANE = 128


def _round_up(x, m):
    return ((x + m - 1) // m) * m


def _num_tensorcores():
    # v7x has 2 TensorCores per chip; v5e/v6e have 1.  Detect defensively; default
    # to 1 (never splits small batches unnecessarily on single-TC chips).
    try:
        dev = jax.devices()[0]
        for attr in ("num_cores", "core_count"):
            n = getattr(dev, attr, None)
            if isinstance(n, int) and n > 0:
                return n
    except Exception:
        pass
    return 1


def _plan_tiles(n_batch, tile_cap, num_cores):
    """Pick a lane-aligned batch tile and padded batch size.

    Single-TC (v5e/v6e): one grid step whenever the batch fits under the cap.
    Dual-TC   (v7x):     an even number of equal-size steps so neither core idles.
    """
    tile_cap = max(_LANE, (tile_cap // _LANE) * _LANE)
    n_aligned = _round_up(max(n_batch, 1), _LANE)

    if num_cores > 1 and n_aligned >= 2 * _LANE:
        if n_aligned <= 2 * tile_cap:
            tile_n = _round_up(n_aligned // 2, _LANE)   # exactly 2 equal steps
        else:
            tile_n = tile_cap
    else:
        tile_n = min(tile_cap, n_aligned)               # minimize grid steps

    n_pad = _round_up(n_batch, tile_n)
    if num_cores > 1:
        steps = n_pad // tile_n
        if steps > 1 and steps % 2 == 1:
            n_pad += tile_n                             # even grid for 2 TCs
    return tile_n, n_pad


# ----------------------------------------------------------------------------
# Kernel factory: full MLP forward on one batch tile, (feature, batch) layout.
# refs: (x_ref, w_aug_0, ..., w_aug_{L-1}, out_ref)
#   x_ref   : [num_inputs, tile_n]    (batch on lanes)
#   w_aug_i : [out_i, in_i + 1]       (last column is the bias, full array resident)
#   out_ref : [num_outputs, tile_n]   (lane-dense store)
# ----------------------------------------------------------------------------
def _make_pinn_kernel(layer_in_dims, bf16_tanh=False):
    n_linear = len(layer_in_dims)

    def kernel(x_ref, *refs):
        out_ref = refs[-1]
        w_refs = refs[:-1]

        h = x_ref[...].astype(jnp.float32)                       # [in, tile_n]
        for i, d_in in enumerate(layer_in_dims):
            w_aug = w_refs[i][...].astype(jnp.float32)            # [out, in+1]
            w = w_aug[:, :d_in]                                   # [out, in]
            b = w_aug[:, d_in:d_in + 1]                           # [out, 1]
            # HIGHEST precision: keep full f32 mantissa through the MXU passes
            # (MXU has huge slack at these 32-wide layers; tanh/EUP is the limit).
            h = jnp.dot(w, h,
                        precision=lax.Precision.HIGHEST,
                        preferred_element_type=jnp.float32) + b   # [out, tile_n]
            if i < n_linear - 1:                                  # Tanh between layers
                if bf16_tanh:
                    # Optional (v6e/v7x only): halve the EUP cost; NOT default —
                    # PINN derivative accuracy prefers f32 activations.
                    h = jnp.tanh(h.astype(jnp.bfloat16)).astype(jnp.float32)
                else:
                    h = jnp.tanh(h)
        out_ref[...] = h.astype(out_ref.dtype)

    return kernel


# ----------------------------------------------------------------------------
# Wrapper: transposes to the lane-dense layout, pads the batch, folds biases into
# the weights, builds grid / BlockSpecs, and returns the standard [N, num_outputs].
# ----------------------------------------------------------------------------
def pinn_forward(x, weights, biases, *, tile_n=2048, bf16_tanh=False):
    N, num_inputs = x.shape
    num_outputs = weights[-1].shape[0]

    num_cores = _num_tensorcores()
    tile_n, n_pad = _plan_tiles(N, tile_n, num_cores)
    grid = (n_pad // tile_n,)

    # [N, num_inputs] -> [num_inputs, n_pad]  (batch on the lane axis, zero tail)
    x_t = jnp.zeros((num_inputs, n_pad), dtype=x.dtype).at[:, :N].set(x.T)

    # Fold each bias into its weight as an extra column: W_aug = [W | b].
    w_augs = [jnp.concatenate([w, b.reshape(w.shape[0], 1).astype(w.dtype)], axis=1)
              for w, b in zip(weights, biases)]

    in_specs = [pl.BlockSpec((num_inputs, tile_n), lambda i: (0, i))]
    for w_aug in w_augs:
        # Tiny params -> full array resident, constant block index (no re-DMA).
        in_specs.append(pl.BlockSpec(w_aug.shape, lambda i: (0, 0)))

    out_spec = pl.BlockSpec((num_outputs, tile_n), lambda i: (0, i))

    kernel = _make_pinn_kernel(tuple(w.shape[1] for w in weights), bf16_tanh)

    out_t = pl.pallas_call(
        kernel,
        out_shape=jax.ShapeDtypeStruct((num_outputs, n_pad), x.dtype),
        grid_spec=pltpu.PrefetchScalarGridSpec(
            num_scalar_prefetch=0,
            grid=grid,
            in_specs=in_specs,
            out_specs=out_spec,
        ),
        compiler_params=pltpu.CompilerParams(
            dimension_semantics=("parallel",),   # harmless on 1-TC, shards on v7x
        ),
    )(x_t, *w_augs)

    # Layout plumbing back to the PyTorch convention: [N, num_outputs].
    return out_t[:, :N].T


# ----------------------------------------------------------------------------
# Deterministic parameter init (xavier_normal_ weights, zero bias), matching the
# shapes implied by PINN.__init__.  Weights in PyTorch [out_features, in_features]
# layout; biases as [out_features, 1].
# ----------------------------------------------------------------------------
def init_pinn_params(key, num_inputs, num_layers, num_neurons, num_outputs,
                     dtype=jnp.float32):
    dims = [num_inputs] + [num_neurons] * (num_layers + 1) + [num_outputs]
    weights, biases = [], []
    for fan_in, fan_out in zip(dims[:-1], dims[1:]):
        key, sub = jax.random.split(key)
        std = math.sqrt(2.0 / (fan_in + fan_out))  # xavier normal, gain=1
        w = std * jax.random.normal(sub, (fan_out, fan_in), dtype=dtype)
        b = jnp.zeros((fan_out, 1), dtype=dtype)
        weights.append(w)
        biases.append(b)
    return weights, biases


def pinn_reference(x, weights, biases):
    h = x
    for i, (w, b) in enumerate(zip(weights, biases)):
        h = h @ w.T + b[:, 0]
        if i < len(weights) - 1:
            h = jnp.tanh(h)
    return h


if __name__ == "__main__":
    # PINN-typical small shapes: 3 inputs (x, y, t), num_layers=2 -> 4 Linear layers
    # of width 32, 1 output.
    num_inputs, num_layers, num_neurons, num_outputs = 3, 2, 32, 1

    key = jax.random.PRNGKey(0)
    weights, biases = init_pinn_params(
        key, num_inputs, num_layers, num_neurons, num_outputs
    )

    ok = True
    for batch in (384, 200):   # lane-multiple batch and an odd batch (pad path)
        key, kx = jax.random.split(key)
        x = jax.random.normal(kx, (batch, num_inputs), dtype=jnp.float32)

        out = pinn_forward(x, weights, biases)
        out = jax.block_until_ready(out)

        ref = pinn_reference(x, weights, biases)
        ok &= out.shape == (batch, num_outputs)
        ok &= bool(jnp.allclose(out, ref, atol=1e-5, rtol=1e-4))

    assert ok, "mismatch vs reference"
    print("KERNEL_OK")
</pallas_src>

<mosaic_0001>
module attributes {stable_mosaic.version = 11 : i64} {
  func.func @kernel(%arg0: i32, %arg1: memref<3x384xf32, #tpu.memory_space<vmem>>, %arg2: memref<32x4xf32, #tpu.memory_space<vmem>>, %arg3: memref<32x33xf32, #tpu.memory_space<vmem>>, %arg4: memref<32x33xf32, #tpu.memory_space<vmem>>, %arg5: memref<1x33xf32, #tpu.memory_space<vmem>>, %arg6: memref<1x384xf32, #tpu.memory_space<vmem>>) attributes {dimension_semantics = [#tpu.dimension_semantics<parallel>], iteration_bounds = array<i64: 1>, scalar_prefetch = 0 : i64, scratch_operands = 0 : i64, tpu.core_type = #tpu.core_type<tc>, window_params = [{transform_indices = @transform_0, window_bounds = array<i64: 3, 384>}, {pipeline_mode = #tpu.pipeline_mode<synchronous>, transform_indices = @transform_1, window_bounds = array<i64: 32, 4>}, {pipeline_mode = #tpu.pipeline_mode<synchronous>, transform_indices = @transform_2, window_bounds = array<i64: 32, 33>}, {pipeline_mode = #tpu.pipeline_mode<synchronous>, transform_indices = @transform_3, window_bounds = array<i64: 32, 33>}, {pipeline_mode = #tpu.pipeline_mode<synchronous>, transform_indices = @transform_4, window_bounds = array<i64: 1, 33>}, {transform_indices = @transform_5, window_bounds = array<i64: 1, 384>}]} {
    %c0 = arith.constant 0 : index
    %c0_0 = arith.constant 0 : index
    %0 = vector.load %arg1[%c0, %c0_0] : memref<3x384xf32, #tpu.memory_space<vmem>>, vector<3x384xf32>
    %c0_1 = arith.constant 0 : index
    %c0_2 = arith.constant 0 : index
    %1 = vector.load %arg2[%c0_1, %c0_2] : memref<32x4xf32, #tpu.memory_space<vmem>>, vector<32x4xf32>
    %2 = vector.extract_strided_slice %1 {offsets = [0, 0], sizes = [32, 3], strides = [1, 1]} : vector<32x4xf32> to vector<32x3xf32>
    %3 = vector.extract_strided_slice %1 {offsets = [0, 3], sizes = [32, 1], strides = [1, 1]} : vector<32x4xf32> to vector<32x1xf32>
    %cst = arith.constant dense<0.000000e+00> : vector<32x384xf32>
    %4 = tpu.matmul %2, %0, %cst {dimension_numbers = #tpu.dot_dimension_numbers<[1], [0], [0], [1], [0, 0, 1, 1], [], []>, precision = #tpu.contract_precision<fp32>} : vector<32x3xf32>, vector<3x384xf32>, vector<32x384xf32> -> vector<32x384xf32>
    %5 = vector.broadcast %3 : vector<32x1xf32> to vector<32x384xf32>
    %6 = arith.addf %4, %5 : vector<32x384xf32>
    %7 = math.tanh %6 : vector<32x384xf32>
    %c0_3 = arith.constant 0 : index
    %c0_4 = arith.constant 0 : index
    %8 = vector.load %arg3[%c0_3, %c0_4] : memref<32x33xf32, #tpu.memory_space<vmem>>, vector<32x33xf32>
    %9 = vector.extract_strided_slice %8 {offsets = [0, 0], sizes = [32, 32], strides = [1, 1]} : vector<32x33xf32> to vector<32x32xf32>
    %10 = vector.extract_strided_slice %8 {offsets = [0, 32], sizes = [32, 1], strides = [1, 1]} : vector<32x33xf32> to vector<32x1xf32>
    %cst_5 = arith.constant dense<0.000000e+00> : vector<32x384xf32>
    %11 = tpu.matmul %9, %7, %cst_5 {dimension_numbers = #tpu.dot_dimension_numbers<[1], [0], [0], [1], [0, 0, 1, 1], [], []>, precision = #tpu.contract_precision<fp32>} : vector<32x32xf32>, vector<32x384xf32>, vector<32x384xf32> -> vector<32x384xf32>
    %12 = vector.broadcast %10 : vector<32x1xf32> to vector<32x384xf32>
    %13 = arith.addf %11, %12 : vector<32x384xf32>
    %14 = math.tanh %13 : vector<32x384xf32>
    %c0_6 = arith.constant 0 : index
    %c0_7 = arith.constant 0 : index
    %15 = vector.load %arg4[%c0_6, %c0_7] : memref<32x33xf32, #tpu.memory_space<vmem>>, vector<32x33xf32>
    %16 = vector.extract_strided_slice %15 {offsets = [0, 0], sizes = [32, 32], strides = [1, 1]} : vector<32x33xf32> to vector<32x32xf32>
    %17 = vector.extract_strided_slice %15 {offsets = [0, 32], sizes = [32, 1], strides = [1, 1]} : vector<32x33xf32> to vector<32x1xf32>
    %cst_8 = arith.constant dense<0.000000e+00> : vector<32x384xf32>
    %18 = tpu.matmul %16, %14, %cst_8 {dimension_numbers = #tpu.dot_dimension_numbers<[1], [0], [0], [1], [0, 0, 1, 1], [], []>, precision = #tpu.contract_precision<fp32>} : vector<32x32xf32>, vector<32x384xf32>, vector<32x384xf32> -> vector<32x384xf32>
    %19 = vector.broadcast %17 : vector<32x1xf32> to vector<32x384xf32>
    %20 = arith.addf %18, %19 : vector<32x384xf32>
    %21 = math.tanh %20 : vector<32x384xf32>
    %c0_9 = arith.constant 0 : index
    %c0_10 = arith.constant 0 : index
    %22 = vector.load %arg5[%c0_9, %c0_10] : memref<1x33xf32, #tpu.memory_space<vmem>>, vector<1x33xf32>
    %23 = vector.extract_strided_slice %22 {offsets = [0, 0], sizes = [1, 32], strides = [1, 1]} : vector<1x33xf32> to vector<1x32xf32>
    %24 = vector.extract_strided_slice %22 {offsets = [0, 32], sizes = [1, 1], strides = [1, 1]} : vector<1x33xf32> to vector<1x1xf32>
    %cst_11 = arith.constant dense<0.000000e+00> : vector<1x384xf32>
    %25 = tpu.matmul %23, %21, %cst_11 {dimension_numbers = #tpu.dot_dimension_numbers<[1], [0], [0], [1], [0, 0, 1, 1], [], []>, precision = #tpu.contract_precision<fp32>} : vector<1x32xf32>, vector<32x384xf32>, vector<1x384xf32> -> vector<1x384xf32>
    %26 = vector.broadcast %24 : vector<1x1xf32> to vector<1x384xf32>
    %27 = arith.addf %25, %26 : vector<1x384xf32>
    %c0_12 = arith.constant 0 : index
    %c0_13 = arith.constant 0 : index
    %28 = vector.load %arg6[%c0_12, %c0_13] : memref<1x384xf32, #tpu.memory_space<vmem>>, vector<1x384xf32>
    tpu.vector_store %arg6[%c0_12, %c0_13], %27 {strides = array<i32>} : memref<1x384xf32, #tpu.memory_space<vmem>>, vector<1x384xf32>,
    return
  }
  func.func @transform_0(%arg0: i32) -> (i32, i32) {
    %c0_i32 = arith.constant 0 : i32
    %c0_i32_0 = arith.constant 0 : i32
    return %c0_i32, %arg0 : i32, i32
  }
  func.func @transform_1(%arg0: i32) -> (i32, i32) {
    %c0_i32 = arith.constant 0 : i32
    %c0_i32_0 = arith.constant 0 : i32
    %c0_i32_1 = arith.constant 0 : i32
    return %c0_i32, %c0_i32_0 : i32, i32
  }
  func.func @transform_2(%arg0: i32) -> (i32, i32) {
    %c0_i32 = arith.constant 0 : i32
    %c0_i32_0 = arith.constant 0 : i32
    %c0_i32_1 = arith.constant 0 : i32
    return %c0_i32, %c0_i32_0 : i32, i32
  }
  func.func @transform_3(%arg0: i32) -> (i32, i32) {
    %c0_i32 = arith.constant 0 : i32
    %c0_i32_0 = arith.constant 0 : i32
    %c0_i32_1 = arith.constant 0 : i32
    return %c0_i32, %c0_i32_0 : i32, i32
  }
  func.func @transform_4(%arg0: i32) -> (i32, i32) {
    %c0_i32 = arith.constant 0 : i32
    %c0_i32_0 = arith.constant 0 : i32
    %c0_i32_1 = arith.constant 0 : i32
    return %c0_i32, %c0_i32_0 : i32, i32
  }
  func.func @transform_5(%arg0: i32) -> (i32, i32) {
    %c0_i32 = arith.constant 0 : i32
    %c0_i32_0 = arith.constant 0 : i32
    return %c0_i32, %arg0 : i32, i32
  }
}

</mosaic_0001>

<llo_original>
// kernel: tpu_custom_call.1
$region0: #{tpu_custom_call.1}
  #allocation0 [shape = 'u32[]', space=smem, size = 0x4, offset = 0x4, fixed_abs, tag = 'smem constant byte address 0x4 - core index']
  #allocation1 [shape = 'u32[72,128]{1,0:T(1,128)}', space=vmem, size = 0x9000, scoped, tag = 'internal scratch']
  %s0 = inlined_call_operand.hbm [shape: f32[3,384], index: 0, kind: input, shape index: {}]
  %s1 = inlined_call_operand.vmem [shape: f32[32,4], index: 1, kind: input, shape index: {}]
  %s2 = inlined_call_operand.vmem [shape: f32[32,33], index: 2, kind: input, shape index: {}]
  %s3 = inlined_call_operand.hbm [shape: f32[32,33], index: 3, kind: input, shape index: {}]
  %s4 = inlined_call_operand.vmem [shape: f32[1,33], index: 4, kind: input, shape index: {}]
  %s5 = inlined_call_operand.hbm [shape: f32[1,384], index: 5, kind: output, shape index: {}]
  %s6 = sld [smem:[#allocation0]]
  $region38: #{tpu_custom_call.1} parent=0
    _
  %s8 = ssub.s32 1, %s6
  %s9 = scalar_select 0, %s8, %s6
  $region1: #{tpu_custom_call.1} parent=0
    #allocation2 [shape = 'u8[6144]{0}', space=vmem, size = 0x1800, scoped, tag = 'input window, operand 0, single buffered']
    #allocation3 [shape = 's32[1]{0}', space=sflag, size = 0x4, scoped, tag = 'scoped memory for tpu_custom_call.1']
    #allocation4 [shape = 's32[1]{0}', space=sflag, size = 0x4, scoped, tag = 'scoped memory for tpu_custom_call.1']
    #allocation5 [shape = 'u8[16384]{0}', space=vmem, size = 0x4000, scoped, tag = 'input window, operand 3, single buffered']
    #allocation6 [shape = 's32[1]{0}', space=sflag, size = 0x4, scoped, tag = 'scoped memory for tpu_custom_call.1']
    #allocation7 [shape = 'u8[1536]{0}', space=vmem, size = 0x800, scoped, tag = 'output window, operand 0, single buffered']
    %10 = vsyncpa [#allocation3], 0
    %11 = vsyncpa [#allocation6], 0
    %12 = vsyncpa [#allocation4], 0
    // Predicated region
    $region2: #{tpu_custom_call.1} parent=1 // pred_check
      _
    $region3: #{tpu_custom_call.1} parent=1 // pred_check_branch
      %14 = sbr.rel (0) target = $region5
    $region4: #{tpu_custom_call.1} parent=1 // pred_region
      %16 = vsyncadd [#allocation3], 0
      %s18 = sshll.u32 %s0, 4
      %s19 = int_to_ptr.hbm [resolvable:$true] %s18
      %s20 = sshll.u32 [#allocation2], 4
      %s21 = int_to_ptr.vmem [resolvable:$true] %s20
      %23 = dma.hbm_to_vmem [thread:$0]  %s19, 192, %s21, [#allocation3]
    $region5: #{tpu_custom_call.1} parent=1 // pred_fallthru
      _
    // Predicated region
    $region6: #{tpu_custom_call.1} parent=1 // pred_check
      _
    $region7: #{tpu_custom_call.1} parent=1 // pred_check_branch
      %25 = sbr.rel (0) target = $region9
    $region8: #{tpu_custom_call.1} parent=1 // pred_region
      _
    $region9: #{tpu_custom_call.1} parent=1 // pred_fallthru
      _
    // Predicated region
    $region10: #{tpu_custom_call.1} parent=1 // pred_check
      _
    $region11: #{tpu_custom_call.1} parent=1 // pred_check_branch
      %27 = sbr.rel (0) target = $region13
    $region12: #{tpu_custom_call.1} parent=1 // pred_region
      _
    $region13: #{tpu_custom_call.1} parent=1 // pred_fallthru
      _
    // Predicated region
    $region14: #{tpu_custom_call.1} parent=1 // pred_check
      _
    $region15: #{tpu_custom_call.1} parent=1 // pred_check_branch
      %29 = sbr.rel (0) target = $region17
    $region16: #{tpu_custom_call.1} parent=1 // pred_region
      %31 = vsyncadd [#allocation6], 0
      %s32 = sshll.u32 %s3, 4
      %s33 = int_to_ptr.hbm [resolvable:$true] %s32
      %s34 = sshll.u32 [#allocation5], 4
      %s35 = int_to_ptr.vmem [resolvable:$true] %s34
      %40 = dma.hbm_to_vmem [thread:$0]  %s33, 512, %s35, [#allocation6], 128, 128, 8
    $region17: #{tpu_custom_call.1} parent=1 // pred_fallthru
      _
    // Predicated region
    $region18: #{tpu_custom_call.1} parent=1 // pred_check
      _
    $region19: #{tpu_custom_call.1} parent=1 // pred_check_branch
      %42 = sbr.rel (0) target = $region21
    $region20: #{tpu_custom_call.1} parent=1 // pred_region
      _
    $region21: #{tpu_custom_call.1} parent=1 // pred_fallthru
      _
    // Predicated region
    $region22: #{tpu_custom_call.1} parent=1 // pred_check
      _
    $region23: #{tpu_custom_call.1} parent=1 // pred_check_branch
      %44 = sbr.rel (0) target = $region25
    $region24: #{tpu_custom_call.1} parent=1 // pred_region
      %46 = dma.done [#allocation3], 192
    $region25: #{tpu_custom_call.1} parent=1 // pred_fallthru
      _
    // Predicated region
    $region26: #{tpu_custom_call.1} parent=1 // pred_check
      _
    $region27: #{tpu_custom_call.1} parent=1 // pred_check_branch
      %48 = sbr.rel (0) target = $region29
    $region28: #{tpu_custom_call.1} parent=1 // pred_region
      %50 = dma.done [#allocation6], 512
    $region29: #{tpu_custom_call.1} parent=1 // pred_fallthru
      _
    %v51 = vld [vmem:[#allocation2] sm:$0x77]
    %v52 = vld [vmem:[#allocation2 + $0x8] sm:$0x7]
    %v53 = vld [vmem:[%s1] sm:$0xff]
    %v54 = vld [vmem:[%s1 + $0x8] sm:$0xff]
    %v55 = vld [vmem:[%s1 + $0x10] sm:$0xff]
    %v56 = vld [vmem:[%s1 + $0x18] sm:$0xff]
    %58 = vset.pattern.permute.xlu0 3
    %59 = vperm.xlu0 %58, %v53
    %v60 = vpop.permute.xlu0 %59
    %63 = vset.pattern.permute.xlu0 3
    %64 = vperm.xlu0 %63, %v54
    %v65 = vpop.permute.xlu0 %64
    %68 = vset.pattern.permute.xlu0 3
    %69 = vperm.xlu0 %68, %v55
    %v70 = vpop.permute.xlu0 %69
    %73 = vset.pattern.permute.xlu0 3
    %74 = vperm.xlu0 %73, %v56
    %v75 = vpop.permute.xlu0 %74
    %79 = vst [vmem:[#allocation1] ss:$2 sm:$0xff] %v51
    %s80 = scalar_lea.vmem [#allocation1], 16
    %81 = vst [vmem:[%s80] ss:$2 sm:$0xff] %v52
    %v82 = vld.sshfl [vmem:[#allocation1] sm:$0xff pattern:$0x75316420]
    %v83 = vld.sshfl [vmem:[#allocation1 + $0x8] sm:$0xff pattern:$0x75316420]
    %v84 = vld.sshfl [vmem:[#allocation1 + $0x10] sm:$0xff pattern:$0x75316420]
    %vm85 = vcmask 23552
    %v86 = vsel %vm85, %v53, 0
    %v88 = vsel %vm85, %v54, 0
    %v90 = vsel %vm85, %v55, 0
    %v92 = vsel %vm85, %v56, 0
    %vm94 = vcmask 1042432
    %v95 = vsel %vm94, %v82, 0
    %v97 = vsel %vm94, %v83, 0
    %v99 = vsel %vm94, %v84, 0
    %101 = vmatpush.msra.mxu0 0.0
    %102 = vmatpush.msra.mxu0 0.0
    %103 = vmatpush.msra.mxu0 0.0
    %104 = vmatpush.msra.mxu0 0.0
    %105 = vmatpush.msra.mxu0 0.0
    %106 = vmatpush.msra.mxu0 0.0
    %107 = vmatpush.msra.mxu0 0.0
    %108 = vmatpush.msra.mxu0 0.0
    %109 = vmatpush.msra.mxu0 0.0
    %110 = vmatpush.msra.mxu0 0.0
    %111 = vmatpush.msra.mxu0 0.0
    %112 = vmatpush.msra.mxu0 0.0
    %113 = vmatpush.msra.mxu0 0.0
    %114 = vmatpush.msra.mxu0 0.0
    %115 = vmatpush.msra.mxu0 0.0
    %v116 = vand.u32 %v95, 4294901760
    %117 = vmatpush.msra.mxu0 %v116
    %v118 = vand.u32 %v86, 4294901760
    %v119 = vsub.f32 %v86, %v118
    %v120 = vand.u32 %v119, 4294901760
    %v121 = vsub.f32 %v119, %v120
    %v122 = vand.u32 %v121, 4294901760
    %123 = vmatmul.f32.gmra.mxu0 %v122
    %v124 = vpop.f32.mrf.mxu0
    %v125 = vadd.f32 %v60, %v124
    %v126 = vand.u32 %v88, 4294901760
    %v127 = vsub.f32 %v88, %v126
    %v128 = vand.u32 %v127, 4294901760
    %v129 = vsub.f32 %v127, %v128
    %v130 = vand.u32 %v129, 4294901760
    %131 = vmatmul.f32.gmra.mxu0 %v130
    %v132 = vpop.f32.mrf.mxu0
    %v133 = vadd.f32 %v65, %v132
    %v134 = vand.u32 %v90, 4294901760
    %v135 = vsub.f32 %v90, %v134
    %v136 = vand.u32 %v135, 4294901760
    %v137 = vsub.f32 %v135, %v136
    %v138 = vand.u32 %v137, 4294901760
    %139 = vmatmul.f32.gmra.mxu0 %v138
    %v140 = vpop.f32.mrf.mxu0
    %v141 = vadd.f32 %v70, %v140
    %v142 = vand.u32 %v92, 4294901760
    %v143 = vsub.f32 %v92, %v142
    %v144 = vand.u32 %v143, 4294901760
    %v145 = vsub.f32 %v143, %v144
    %v146 = vand.u32 %v145, 4294901760
    %147 = vmatmul.f32.gmra.mxu0 %v146
    %v148 = vpop.f32.mrf.mxu0
    %v149 = vadd.f32 %v75, %v148
    %150 = vdwg.mxu0
    %151 = vmatpush.msra.mxu0 0.0
    %152 = vmatpush.msra.mxu0 0.0
    %153 = vmatpush.msra.mxu0 0.0
    %154 = vmatpush.msra.mxu0 0.0
    %155 = vmatpush.msra.mxu0 0.0
    %156 = vmatpush.msra.mxu0 0.0
    %157 = vmatpush.msra.mxu0 0.0
    %158 = vmatpush.msra.mxu0 0.0
    %159 = vmatpush.msra.mxu0 0.0
    %160 = vmatpush.msra.mxu0 0.0
    %161 = vmatpush.msra.mxu0 0.0
    %162 = vmatpush.msra.mxu0 0.0
    %163 = vmatpush.msra.mxu0 0.0
    %164 = vmatpush.msra.mxu0 0.0
    %165 = vmatpush.msra.mxu0 0.0
    %v166 = vand.u32 %v95, 4294901760
    %v167 = vsub.f32 %v95, %v166
    %v168 = vand.u32 %v167, 4294901760
    %v169 = vsub.f32 %v167, %v168
    %v170 = vand.u32 %v169, 4294901760
    %171 = vmatpush.msra.mxu0 %v170
    %v172 = vand.u32 %v86, 4294901760
    %173 = vmatmul.f32.gmra.mxu0 %v172
    %v174 = vpop.f32.mrf.mxu0
    %v175 = vadd.f32 %v125, %v174
    %v176 = vand.u32 %v88, 4294901760
    %177 = vmatmul.f32.gmra.mxu0 %v176
    %v178 = vpop.f32.mrf.mxu0
    %v179 = vadd.f32 %v133, %v178
    %v180 = vand.u32 %v90, 4294901760
    %181 = vmatmul.f32.gmra.mxu0 %v180
    %v182 = vpop.f32.mrf.mxu0
    %v183 = vadd.f32 %v141, %v182
    %v184 = vand.u32 %v92, 4294901760
    %185 = vmatmul.f32.gmra.mxu0 %v184
    %v186 = vpop.f32.mrf.mxu0
    %v187 = vadd.f32 %v149, %v186
    %188 = vdwg.mxu0
    %189 = vmatpush.msra.mxu0 0.0
    %190 = vmatpush.msra.mxu0 0.0
    %191 = vmatpush.msra.mxu0 0.0
    %192 = vmatpush.msra.mxu0 0.0
    %193 = vmatpush.msra.mxu0 0.0
    %194 = vmatpush.msra.mxu0 0.0
    %195 = vmatpush.msra.mxu0 0.0
    %196 = vmatpush.msra.mxu0 0.0
    %197 = vmatpush.msra.mxu0 0.0
    %198 = vmatpush.msra.mxu0 0.0
    %199 = vmatpush.msra.mxu0 0.0
    %200 = vmatpush.msra.mxu0 0.0
    %201 = vmatpush.msra.mxu0 0.0
    %202 = vmatpush.msra.mxu0 0.0
    %203 = vmatpush.msra.mxu0 0.0
    %v204 = vand.u32 %v95, 4294901760
    %v205 = vsub.f32 %v95, %v204
    %206 = vmatpush.msra.mxu0 %v205
    %v207 = vand.u32 %v86, 4294901760
    %v208 = vsub.f32 %v86, %v207
    %209 = vmatmul.f32.gmra.mxu0 %v208
    %v210 = vpop.f32.mrf.mxu0
    %v211 = vadd.f32 %v175, %v210
    %v212 = vand.u32 %v88, 4294901760
    %v213 = vsub.f32 %v88, %v212
    %214 = vmatmul.f32.gmra.mxu0 %v213
    %v215 = vpop.f32.mrf.mxu0
    %v216 = vadd.f32 %v179, %v215
    %v217 = vand.u32 %v90, 4294901760
    %v218 = vsub.f32 %v90, %v217
    %219 = vmatmul.f32.gmra.mxu0 %v218
    %v220 = vpop.f32.mrf.mxu0
    %v221 = vadd.f32 %v183, %v220
    %v222 = vand.u32 %v92, 4294901760
    %v223 = vsub.f32 %v92, %v222
    %224 = vmatmul.f32.gmra.mxu0 %v223
    %v225 = vpop.f32.mrf.mxu0
    %v226 = vadd.f32 %v187, %v225
    %227 = vdwg.mxu0
    %228 = vmatpush.msra.mxu0 0.0
    %229 = vmatpush.msra.mxu0 0.0
    %230 = vmatpush.msra.mxu0 0.0
    %231 = vmatpush.msra.mxu0 0.0
    %232 = vmatpush.msra.mxu0 0.0
    %233 = vmatpush.msra.mxu0 0.0
    %234 = vmatpush.msra.mxu0 0.0
    %235 = vmatpush.msra.mxu0 0.0
    %236 = vmatpush.msra.mxu0 0.0
    %237 = vmatpush.msra.mxu0 0.0
    %238 = vmatpush.msra.mxu0 0.0
    %239 = vmatpush.msra.mxu0 0.0
    %240 = vmatpush.msra.mxu0 0.0
    %241 = vmatpush.msra.mxu0 0.0
    %242 = vmatpush.msra.mxu0 0.0
    %v243 = vand.u32 %v95, 4294901760
    %244 = vmatpush.msra.mxu0 %v243
    %v245 = vand.u32 %v86, 4294901760
    %v246 = vsub.f32 %v86, %v245
    %v247 = vand.u32 %v246, 4294901760
    %248 = vmatmul.f32.gmra.mxu0 %v247
    %v249 = vpop.f32.mrf.mxu0
    %v250 = vadd.f32 %v211, %v249
    %v251 = vand.u32 %v88, 4294901760
    %v252 = vsub.f32 %v88, %v251
    %v253 = vand.u32 %v252, 4294901760
    %254 = vmatmul.f32.gmra.mxu0 %v253
    %v255 = vpop.f32.mrf.mxu0
    %v256 = vadd.f32 %v216, %v255
    %v257 = vand.u32 %v90, 4294901760
    %v258 = vsub.f32 %v90, %v257
    %v259 = vand.u32 %v258, 4294901760
    %260 = vmatmul.f32.gmra.mxu0 %v259
    %v261 = vpop.f32.mrf.mxu0
    %v262 = vadd.f32 %v221, %v261
    %v263 = vand.u32 %v92, 4294901760
    %v264 = vsub.f32 %v92, %v263
    %v265 = vand.u32 %v264, 4294901760
    %266 = vmatmul.f32.gmra.mxu0 %v265
    %v267 = vpop.f32.mrf.mxu0
    %v268 = vadd.f32 %v226, %v267
    %269 = vdwg.mxu0
    %270 = vmatpush.msra.mxu0 0.0
    %271 = vmatpush.msra.mxu0 0.0
    %272 = vmatpush.msra.mxu0 0.0
    %273 = vmatpush.msra.mxu0 0.0
    %274 = vmatpush.msra.mxu0 0.0
    %275 = vmatpush.msra.mxu0 0.0
    %276 = vmatpush.msra.mxu0 0.0
    %277 = vmatpush.msra.mxu0 0.0
    %278 = vmatpush.msra.mxu0 0.0
    %279 = vmatpush.msra.mxu0 0.0
    %280 = vmatpush.msra.mxu0 0.0
    %281 = vmatpush.msra.mxu0 0.0
    %282 = vmatpush.msra.mxu0 0.0
    %283 = vmatpush.msra.mxu0 0.0
    %284 = vmatpush.msra.mxu0 0.0
    %v285 = vand.u32 %v95, 4294901760
    %v286 = vsub.f32 %v95, %v285
    %v287 = vand.u32 %v286, 4294901760
    %288 = vmatpush.msra.mxu0 %v287
    %v289 = vand.u32 %v86, 4294901760
    %290 = vmatmul.f32.gmra.mxu0 %v289
    %v291 = vpop.f32.mrf.mxu0
    %v292 = vadd.f32 %v250, %v291
    %v293 = vand.u32 %v88, 4294901760
    %294 = vmatmul.f32.gmra.mxu0 %v293
    %v295 = vpop.f32.mrf.mxu0
    %v296 = vadd.f32 %v256, %v295
    %v297 = vand.u32 %v90, 4294901760
    %298 = vmatmul.f32.gmra.mxu0 %v297
    %v299 = vpop.f32.mrf.mxu0
    %v300 = vadd.f32 %v262, %v299
    %v301 = vand.u32 %v92, 4294901760
    %302 = vmatmul.f32.gmra.mxu0 %v301
    %v303 = vpop.f32.mrf.mxu0
    %v304 = vadd.f32 %v268, %v303
    %305 = vdwg.mxu0
    %306 = vmatpush.msra.mxu0 0.0
    %307 = vmatpush.msra.mxu0 0.0
    %308 = vmatpush.msra.mxu0 0.0
    %309 = vmatpush.msra.mxu0 0.0
    %310 = vmatpush.msra.mxu0 0.0
    %311 = vmatpush.msra.mxu0 0.0
    %312 = vmatpush.msra.mxu0 0.0
    %313 = vmatpush.msra.mxu0 0.0
    %314 = vmatpush.msra.mxu0 0.0
    %315 = vmatpush.msra.mxu0 0.0
    %316 = vmatpush.msra.mxu0 0.0
    %317 = vmatpush.msra.mxu0 0.0
    %318 = vmatpush.msra.mxu0 0.0
    %319 = vmatpush.msra.mxu0 0.0
    %320 = vmatpush.msra.mxu0 0.0
    %v321 = vand.u32 %v95, 4294901760
    %322 = vmatpush.msra.mxu0 %v321
    %v323 = vand.u32 %v86, 4294901760
    %324 = vmatmul.f32.gmra.mxu0 %v323
    %v325 = vpop.f32.mrf.mxu0
    %v326 = vadd.f32 %v292, %v325
    %v327 = vand.u32 %v88, 4294901760
    %328 = vmatmul.f32.gmra.mxu0 %v327
    %v329 = vpop.f32.mrf.mxu0
    %v330 = vadd.f32 %v296, %v329
    %v331 = vand.u32 %v90, 4294901760
    %332 = vmatmul.f32.gmra.mxu0 %v331
    %v333 = vpop.f32.mrf.mxu0
    %v334 = vadd.f32 %v300, %v333
    %v335 = vand.u32 %v92, 4294901760
    %336 = vmatmul.f32.gmra.mxu0 %v335
    %v337 = vpop.f32.mrf.mxu0
    %v338 = vadd.f32 %v304, %v337
    %339 = vdwg.mxu0
    %340 = vmatpush.msra.mxu0 0.0
    %341 = vmatpush.msra.mxu0 0.0
    %342 = vmatpush.msra.mxu0 0.0
    %343 = vmatpush.msra.mxu0 0.0
    %344 = vmatpush.msra.mxu0 0.0
    %345 = vmatpush.msra.mxu0 0.0
    %346 = vmatpush.msra.mxu0 0.0
    %347 = vmatpush.msra.mxu0 0.0
    %348 = vmatpush.msra.mxu0 0.0
    %349 = vmatpush.msra.mxu0 0.0
    %350 = vmatpush.msra.mxu0 0.0
    %351 = vmatpush.msra.mxu0 0.0
    %352 = vmatpush.msra.mxu0 0.0
    %353 = vmatpush.msra.mxu0 0.0
    %354 = vmatpush.msra.mxu0 0.0
    %v355 = vand.u32 %v97, 4294901760
    %356 = vmatpush.msra.mxu0 %v355
    %v357 = vand.u32 %v86, 4294901760
    %v358 = vsub.f32 %v86, %v357
    %v359 = vand.u32 %v358, 4294901760
    %v360 = vsub.f32 %v358, %v359
    %v361 = vand.u32 %v360, 4294901760
    %362 = vmatmul.f32.gmra.mxu0 %v361
    %v363 = vpop.f32.mrf.mxu0
    %v364 = vadd.f32 %v60, %v363
    %v365 = vand.u32 %v88, 4294901760
    %v366 = vsub.f32 %v88, %v365
    %v367 = vand.u32 %v366, 4294901760
    %v368 = vsub.f32 %v366, %v367
    %v369 = vand.u32 %v368, 4294901760
    %370 = vmatmul.f32.gmra.mxu0 %v369
    %v371 = vpop.f32.mrf.mxu0
    %v372 = vadd.f32 %v65, %v371
    %v373 = vand.u32 %v90, 4294901760
    %v374 = vsub.f32 %v90, %v373
    %v375 = vand.u32 %v374, 4294901760
    %v376 = vsub.f32 %v374, %v375
    %v377 = vand.u32 %v376, 4294901760
    %378 = vmatmul.f32.gmra.mxu0 %v377
    %v379 = vpop.f32.mrf.mxu0
    %v380 = vadd.f32 %v70, %v379
    %v381 = vand.u32 %v92, 4294901760
    %v382 = vsub.f32 %v92, %v381
    %v383 = vand.u32 %v382, 4294901760
    %v384 = vsub.f32 %v382, %v383
    %v385 = vand.u32 %v384, 4294901760
    %386 = vmatmul.f32.gmra.mxu0 %v385
    %v387 = vpop.f32.mrf.mxu0
    %v388 = vadd.f32 %v75, %v387
    %389 = vdwg.mxu0
    %390 = vmatpush.msra.mxu0 0.0
    %391 = vmatpush.msra.mxu0 0.0
    %392 = vmatpush.msra.mxu0 0.0
    %393 = vmatpush.msra.mxu0 0.0
    %394 = vmatpush.msra.mxu0 0.0
    %395 = vmatpush.msra.mxu0 0.0
    %396 = vmatpush.msra.mxu0 0.0
    %397 = vmatpush.msra.mxu0 0.0
    %398 = vmatpush.msra.mxu0 0.0
    %399 = vmatpush.msra.mxu0 0.0
    %400 = vmatpush.msra.mxu0 0.0
    %401 = vmatpush.msra.mxu0 0.0
    %402 = vmatpush.msra.mxu0 0.0
    %403 = vmatpush.msra.mxu0 0.0
    %404 = vmatpush.msra.mxu0 0.0
    %v405 = vand.u32 %v97, 4294901760
    %v406 = vsub.f32 %v97, %v405
    %v407 = vand.u32 %v406, 4294901760
    %v408 = vsub.f32 %v406, %v407
    %v409 = vand.u32 %v408, 4294901760
    %410 = vmatpush.msra.mxu0 %v409
    %v411 = vand.u32 %v86, 4294901760
    %412 = vmatmul.f32.gmra.mxu0 %v411
    %v413 = vpop.f32.mrf.mxu0
    %v414 = vadd.f32 %v364, %v413
    %v415 = vand.u32 %v88, 4294901760
    %416 = vmatmul.f32.gmra.mxu0 %v415
    %v417 = vpop.f32.mrf.mxu0
    %v418 = vadd.f32 %v372, %v417
    %v419 = vand.u32 %v90, 4294901760
    %420 = vmatmul.f32.gmra.mxu0 %v419
    %v421 = vpop.f32.mrf.mxu0
    %v422 = vadd.f32 %v380, %v421
    %v423 = vand.u32 %v92, 4294901760
    %424 = vmatmul.f32.gmra.mxu0 %v423
    %v425 = vpop.f32.mrf.mxu0
    %v426 = vadd.f32 %v388, %v425
    %427 = vdwg.mxu0
    %428 = vmatpush.msra.mxu0 0.0
    %429 = vmatpush.msra.mxu0 0.0
    %430 = vmatpush.msra.mxu0 0.0
    %431 = vmatpush.msra.mxu0 0.0
    %432 = vmatpush.msra.mxu0 0.0
    %433 = vmatpush.msra.mxu0 0.0
    %434 = vmatpush.msra.mxu0 0.0
    %435 = vmatpush.msra.mxu0 0.0
    %436 = vmatpush.msra.mxu0 0.0
    %437 = vmatpush.msra.mxu0 0.0
    %438 = vmatpush.msra.mxu0 0.0
    %439 = vmatpush.msra.mxu0 0.0
    %440 = vmatpush.msra.mxu0 0.0
    %441 = vmatpush.msra.mxu0 0.0
    %442 = vmatpush.msra.mxu0 0.0
    %v443 = vand.u32 %v97, 4294901760
    %v444 = vsub.f32 %v97, %v443
    %445 = vmatpush.msra.mxu0 %v444
    %v446 = vand.u32 %v86, 4294901760
    %v447 = vsub.f32 %v86, %v446
    %448 = vmatmul.f32.gmra.mxu0 %v447
    %v449 = vpop.f32.mrf.mxu0
    %v450 = vadd.f32 %v414, %v449
    %v451 = vand.u32 %v88, 4294901760
    %v452 = vsub.f32 %v88, %v451
    %453 = vmatmul.f32.gmra.mxu0 %v452
    %v454 = vpop.f32.mrf.mxu0
    %v455 = vadd.f32 %v418, %v454
    %v456 = vand.u32 %v90, 4294901760
    %v457 = vsub.f32 %v90, %v456
    %458 = vmatmul.f32.gmra.mxu0 %v457
    %v459 = vpop.f32.mrf.mxu0
    %v460 = vadd.f32 %v422, %v459
    %v461 = vand.u32 %v92, 4294901760
    %v462 = vsub.f32 %v92, %v461
    %463 = vmatmul.f32.gmra.mxu0 %v462
    %v464 = vpop.f32.mrf.mxu0
    %v465 = vadd.f32 %v426, %v464
    %466 = vdwg.mxu0
    %467 = vmatpush.msra.mxu0 0.0
    %468 = vmatpush.msra.mxu0 0.0
    %469 = vmatpush.msra.mxu0 0.0
    %470 = vmatpush.msra.mxu0 0.0
    %471 = vmatpush.msra.mxu0 0.0
    %472 = vmatpush.msra.mxu0 0.0
    %473 = vmatpush.msra.mxu0 0.0
    %474 = vmatpush.msra.mxu0 0.0
    %475 = vmatpush.msra.mxu0 0.0
    %476 = vmatpush.msra.mxu0 0.0
    %477 = vmatpush.msra.mxu0 0.0
    %478 = vmatpush.msra.mxu0 0.0
    %479 = vmatpush.msra.mxu0 0.0
    %480 = vmatpush.msra.mxu0 0.0
    %481 = vmatpush.msra.mxu0 0.0
    %v482 = vand.u32 %v97, 4294901760
    %483 = vmatpush.msra.mxu0 %v482
    %v484 = vand.u32 %v86, 4294901760
    %v485 = vsub.f32 %v86, %v484
    %v486 = vand.u32 %v485, 4294901760
    %487 = vmatmul.f32.gmra.mxu0 %v486
    %v488 = vpop.f32.mrf.mxu0
    %v489 = vadd.f32 %v450, %v488
    %v490 = vand.u32 %v88, 4294901760
    %v491 = vsub.f32 %v88, %v490
    %v492 = vand.u32 %v491, 4294901760
    %493 = vmatmul.f32.gmra.mxu0 %v492
    %v494 = vpop.f32.mrf.mxu0
    %v495 = vadd.f32 %v455, %v494
    %v496 = vand.u32 %v90, 4294901760
    %v497 = vsub.f32 %v90, %v496
    %v498 = vand.u32 %v497, 4294901760
    %499 = vmatmul.f32.gmra.mxu0 %v498
    %v500 = vpop.f32.mrf.mxu0
    %v501 = vadd.f32 %v460, %v500
    %v502 = vand.u32 %v92, 4294901760
    %v503 = vsub.f32 %v92, %v502
    %v504 = vand.u32 %v503, 4294901760
    %505 = vmatmul.f32.gmra.mxu0 %v504
    %v506 = vpop.f32.mrf.mxu0
    %v507 = vadd.f32 %v465, %v506
    %508 = vdwg.mxu0
    %509 = vmatpush.msra.mxu0 0.0
    %510 = vmatpush.msra.mxu0 0.0
    %511 = vmatpush.msra.mxu0 0.0
    %512 = vmatpush.msra.mxu0 0.0
    %513 = vmatpush.msra.mxu0 0.0
    %514 = vmatpush.msra.mxu0 0.0
    %515 = vmatpush.msra.mxu0 0.0
    %516 = vmatpush.msra.mxu0 0.0
    %517 = vmatpush.msra.mxu0 0.0
    %518 = vmatpush.msra.mxu0 0.0
    %519 = vmatpush.msra.mxu0 0.0
    %520 = vmatpush.msra.mxu0 0.0
    %521 = vmatpush.msra.mxu0 0.0
    %522 = vmatpush.msra.mxu0 0.0
    %523 = vmatpush.msra.mxu0 0.0
    %v524 = vand.u32 %v97, 4294901760
    %v525 = vsub.f32 %v97, %v524
    %v526 = vand.u32 %v525, 4294901760
    %527 = vmatpush.msra.mxu0 %v526
    %v528 = vand.u32 %v86, 4294901760
    %529 = vmatmul.f32.gmra.mxu0 %v528
    %v530 = vpop.f32.mrf.mxu0
    %v531 = vadd.f32 %v489, %v530
    %v532 = vand.u32 %v88, 4294901760
    %533 = vmatmul.f32.gmra.mxu0 %v532
    %v534 = vpop.f32.mrf.mxu0
    %v535 = vadd.f32 %v495, %v534
    %v536 = vand.u32 %v90, 4294901760
    %537 = vmatmul.f32.gmra.mxu0 %v536
    %v538 = vpop.f32.mrf.mxu0
    %v539 = vadd.f32 %v501, %v538
    %v540 = vand.u32 %v92, 4294901760
    %541 = vmatmul.f32.gmra.mxu0 %v540
    %v542 = vpop.f32.mrf.mxu0
    %v543 = vadd.f32 %v507, %v542
    %544 = vdwg.mxu0
    %545 = vmatpush.msra.mxu0 0.0
    %546 = vmatpush.msra.mxu0 0.0
    %547 = vmatpush.msra.mxu0 0.0
    %548 = vmatpush.msra.mxu0 0.0
    %549 = vmatpush.msra.mxu0 0.0
    %550 = vmatpush.msra.mxu0 0.0
    %551 = vmatpush.msra.mxu0 0.0
    %552 = vmatpush.msra.mxu0 0.0
    %553 = vmatpush.msra.mxu0 0.0
    %554 = vmatpush.msra.mxu0 0.0
    %555 = vmatpush.msra.mxu0 0.0
    %556 = vmatpush.msra.mxu0 0.0
    %557 = vmatpush.msra.mxu0 0.0
    %558 = vmatpush.msra.mxu0 0.0
    %559 = vmatpush.msra.mxu0 0.0
    %v560 = vand.u32 %v97, 4294901760
    %561 = vmatpush.msra.mxu0 %v560
    %v562 = vand.u32 %v86, 4294901760
    %563 = vmatmul.f32.gmra.mxu0 %v562
    %v564 = vpop.f32.mrf.mxu0
    %v565 = vadd.f32 %v531, %v564
    %v566 = vand.u32 %v88, 4294901760
    %567 = vmatmul.f32.gmra.mxu0 %v566
    %v568 = vpop.f32.mrf.mxu0
    %v569 = vadd.f32 %v535, %v568
    %v570 = vand.u32 %v90, 4294901760
    %571 = vmatmul.f32.gmra.mxu0 %v570
    %v572 = vpop.f32.mrf.mxu0
    %v573 = vadd.f32 %v539, %v572
    %v574 = vand.u32 %v92, 4294901760
    %575 = vmatmul.f32.gmra.mxu0 %v574
    %v576 = vpop.f32.mrf.mxu0
    %v577 = vadd.f32 %v543, %v576
    %578 = vdwg.mxu0
    %579 = vmatpush.msra.mxu0 0.0
    %580 = vmatpush.msra.mxu0 0.0
    %581 = vmatpush.msra.mxu0 0.0
    %582 = vmatpush.msra.mxu0 0.0
    %583 = vmatpush.msra.mxu0 0.0
    %584 = vmatpush.msra.mxu0 0.0
    %585 = vmatpush.msra.mxu0 0.0
    %586 = vmatpush.msra.mxu0 0.0
    %587 = vmatpush.msra.mxu0 0.0
    %588 = vmatpush.msra.mxu0 0.0
    %589 = vmatpush.msra.mxu0 0.0
    %590 = vmatpush.msra.mxu0 0.0
    %591 = vmatpush.msra.mxu0 0.0
    %592 = vmatpush.msra.mxu0 0.0
    %593 = vmatpush.msra.mxu0 0.0
    %v594 = vand.u32 %v99, 4294901760
    %595 = vmatpush.msra.mxu0 %v594
    %v596 = vand.u32 %v86, 4294901760
    %v597 = vsub.f32 %v86, %v596
    %v598 = vand.u32 %v597, 4294901760
    %v599 = vsub.f32 %v597, %v598
    %v600 = vand.u32 %v599, 4294901760
    %601 = vmatmul.f32.gmra.mxu0 %v600
    %v602 = vpop.f32.mrf.mxu0
    %v603 = vadd.f32 %v60, %v602
    %v604 = vand.u32 %v88, 4294901760
    %v605 = vsub.f32 %v88, %v604
    %v606 = vand.u32 %v605, 4294901760
    %v607 = vsub.f32 %v605, %v606
    %v608 = vand.u32 %v607, 4294901760
    %609 = vmatmul.f32.gmra.mxu0 %v608
    %v610 = vpop.f32.mrf.mxu0
    %v611 = vadd.f32 %v65, %v610
    %v612 = vand.u32 %v90, 4294901760
    %v613 = vsub.f32 %v90, %v612
    %v614 = vand.u32 %v613, 4294901760
    %v615 = vsub.f32 %v613, %v614
    %v616 = vand.u32 %v615, 4294901760
    %617 = vmatmul.f32.gmra.mxu0 %v616
    %v618 = vpop.f32.mrf.mxu0
    %v619 = vadd.f32 %v70, %v618
    %v620 = vand.u32 %v92, 4294901760
    %v621 = vsub.f32 %v92, %v620
    %v622 = vand.u32 %v621, 4294901760
    %v623 = vsub.f32 %v621, %v622
    %v624 = vand.u32 %v623, 4294901760
    %625 = vmatmul.f32.gmra.mxu0 %v624
    %v626 = vpop.f32.mrf.mxu0
    %v627 = vadd.f32 %v75, %v626
    %628 = vdwg.mxu0
    %629 = vmatpush.msra.mxu0 0.0
    %630 = vmatpush.msra.mxu0 0.0
    %631 = vmatpush.msra.mxu0 0.0
    %632 = vmatpush.msra.mxu0 0.0
    %633 = vmatpush.msra.mxu0 0.0
    %634 = vmatpush.msra.mxu0 0.0
    %635 = vmatpush.msra.mxu0 0.0
    %636 = vmatpush.msra.mxu0 0.0
    %637 = vmatpush.msra.mxu0 0.0
    %638 = vmatpush.msra.mxu0 0.0
    %639 = vmatpush.msra.mxu0 0.0
    %640 = vmatpush.msra.mxu0 0.0
    %641 = vmatpush.msra.mxu0 0.0
    %642 = vmatpush.msra.mxu0 0.0
    %643 = vmatpush.msra.mxu0 0.0
    %v644 = vand.u32 %v99, 4294901760
    %v645 = vsub.f32 %v99, %v644
    %v646 = vand.u32 %v645, 4294901760
    %v647 = vsub.f32 %v645, %v646
    %v648 = vand.u32 %v647, 4294901760
    %649 = vmatpush.msra.mxu0 %v648
    %v650 = vand.u32 %v86, 4294901760
    %651 = vmatmul.f32.gmra.mxu0 %v650
    %v652 = vpop.f32.mrf.mxu0
    %v653 = vadd.f32 %v603, %v652
    %v654 = vand.u32 %v88, 4294901760
    %655 = vmatmul.f32.gmra.mxu0 %v654
    %v656 = vpop.f32.mrf.mxu0
    %v657 = vadd.f32 %v611, %v656
    %v658 = vand.u32 %v90, 4294901760
    %659 = vmatmul.f32.gmra.mxu0 %v658
    %v660 = vpop.f32.mrf.mxu0
    %v661 = vadd.f32 %v619, %v660
    %v662 = vand.u32 %v92, 4294901760
    %663 = vmatmul.f32.gmra.mxu0 %v662
    %v664 = vpop.f32.mrf.mxu0
    %v665 = vadd.f32 %v627, %v664
    %666 = vdwg.mxu0
    %667 = vmatpush.msra.mxu0 0.0
    %668 = vmatpush.msra.mxu0 0.0
    %669 = vmatpush.msra.mxu0 0.0
    %670 = vmatpush.msra.mxu0 0.0
    %671 = vmatpush.msra.mxu0 0.0
    %672 = vmatpush.msra.mxu0 0.0
    %673 = vmatpush.msra.mxu0 0.0
    %674 = vmatpush.msra.mxu0 0.0
    %675 = vmatpush.msra.mxu0 0.0
    %676 = vmatpush.msra.mxu0 0.0
    %677 = vmatpush.msra.mxu0 0.0
    %678 = vmatpush.msra.mxu0 0.0
    %679 = vmatpush.msra.mxu0 0.0
    %680 = vmatpush.msra.mxu0 0.0
    %681 = vmatpush.msra.mxu0 0.0
    %v682 = vand.u32 %v99, 4294901760
    %v683 = vsub.f32 %v99, %v682
    %684 = vmatpush.msra.mxu0 %v683
    %v685 = vand.u32 %v86, 4294901760
    %v686 = vsub.f32 %v86, %v685
    %687 = vmatmul.f32.gmra.mxu0 %v686
    %v688 = vpop.f32.mrf.mxu0
    %v689 = vadd.f32 %v653, %v688
    %v690 = vand.u32 %v88, 4294901760
    %v691 = vsub.f32 %v88, %v690
    %692 = vmatmul.f32.gmra.mxu0 %v691
    %v693 = vpop.f32.mrf.mxu0
    %v694 = vadd.f32 %v657, %v693
    %v695 = vand.u32 %v90, 4294901760
    %v696 = vsub.f32 %v90, %v695
    %697 = vmatmul.f32.gmra.mxu0 %v696
    %v698 = vpop.f32.mrf.mxu0
    %v699 = vadd.f32 %v661, %v698
    %v700 = vand.u32 %v92, 4294901760
    %v701 = vsub.f32 %v92, %v700
    %702 = vmatmul.f32.gmra.mxu0 %v701
    %v703 = vpop.f32.mrf.mxu0
    %v704 = vadd.f32 %v665, %v703
    %705 = vdwg.mxu0
    %706 = vmatpush.msra.mxu0 0.0
    %707 = vmatpush.msra.mxu0 0.0
    %708 = vmatpush.msra.mxu0 0.0
    %709 = vmatpush.msra.mxu0 0.0
    %710 = vmatpush.msra.mxu0 0.0
    %711 = vmatpush.msra.mxu0 0.0
    %712 = vmatpush.msra.mxu0 0.0
    %713 = vmatpush.msra.mxu0 0.0
    %714 = vmatpush.msra.mxu0 0.0
    %715 = vmatpush.msra.mxu0 0.0
    %716 = vmatpush.msra.mxu0 0.0
    %717 = vmatpush.msra.mxu0 0.0
    %718 = vmatpush.msra.mxu0 0.0
    %719 = vmatpush.msra.mxu0 0.0
    %720 = vmatpush.msra.mxu0 0.0
    %v721 = vand.u32 %v99, 4294901760
    %722 = vmatpush.msra.mxu0 %v721
    %v723 = vand.u32 %v86, 4294901760
    %v724 = vsub.f32 %v86, %v723
    %v725 = vand.u32 %v724, 4294901760
    %726 = vmatmul.f32.gmra.mxu0 %v725
    %v727 = vpop.f32.mrf.mxu0
    %v728 = vadd.f32 %v689, %v727
    %v729 = vand.u32 %v88, 4294901760
    %v730 = vsub.f32 %v88, %v729
    %v731 = vand.u32 %v730, 4294901760
    %732 = vmatmul.f32.gmra.mxu0 %v731
    %v733 = vpop.f32.mrf.mxu0
    %v734 = vadd.f32 %v694, %v733
    %v735 = vand.u32 %v90, 4294901760
    %v736 = vsub.f32 %v90, %v735
    %v737 = vand.u32 %v736, 4294901760
    %738 = vmatmul.f32.gmra.mxu0 %v737
    %v739 = vpop.f32.mrf.mxu0
    %v740 = vadd.f32 %v699, %v739
    %v741 = vand.u32 %v92, 4294901760
    %v742 = vsub.f32 %v92, %v741
    %v743 = vand.u32 %v742, 4294901760
    %744 = vmatmul.f32.gmra.mxu0 %v743
    %v745 = vpop.f32.mrf.mxu0
    %v746 = vadd.f32 %v704, %v745
    %747 = vdwg.mxu0
    %748 = vmatpush.msra.mxu0 0.0
    %749 = vmatpush.msra.mxu0 0.0
    %750 = vmatpush.msra.mxu0 0.0
    %751 = vmatpush.msra.mxu0 0.0
    %752 = vmatpush.msra.mxu0 0.0
    %753 = vmatpush.msra.mxu0 0.0
    %754 = vmatpush.msra.mxu0 0.0
    %755 = vmatpush.msra.mxu0 0.0
    %756 = vmatpush.msra.mxu0 0.0
    %757 = vmatpush.msra.mxu0 0.0
    %758 = vmatpush.msra.mxu0 0.0
    %759 = vmatpush.msra.mxu0 0.0
    %760 = vmatpush.msra.mxu0 0.0
    %761 = vmatpush.msra.mxu0 0.0
    %762 = vmatpush.msra.mxu0 0.0
    %v763 = vand.u32 %v99, 4294901760
    %v764 = vsub.f32 %v99, %v763
    %v765 = vand.u32 %v764, 4294901760
    %766 = vmatpush.msra.mxu0 %v765
    %v767 = vand.u32 %v86, 4294901760
    %768 = vmatmul.f32.gmra.mxu0 %v767
    %v769 = vpop.f32.mrf.mxu0
    %v770 = vadd.f32 %v728, %v769
    %v771 = vand.u32 %v88, 4294901760
    %772 = vmatmul.f32.gmra.mxu0 %v771
    %v773 = vpop.f32.mrf.mxu0
    %v774 = vadd.f32 %v734, %v773
    %v775 = vand.u32 %v90, 4294901760
    %776 = vmatmul.f32.gmra.mxu0 %v775
    %v777 = vpop.f32.mrf.mxu0
    %v778 = vadd.f32 %v740, %v777
    %v779 = vand.u32 %v92, 4294901760
    %780 = vmatmul.f32.gmra.mxu0 %v779
    %v781 = vpop.f32.mrf.mxu0
    %v782 = vadd.f32 %v746, %v781
    %783 = vdwg.mxu0
    %784 = vmatpush.msra.mxu0 0.0
    %785 = vmatpush.msra.mxu0 0.0
    %786 = vmatpush.msra.mxu0 0.0
    %787 = vmatpush.msra.mxu0 0.0
    %788 = vmatpush.msra.mxu0 0.0
    %789 = vmatpush.msra.mxu0 0.0
    %790 = vmatpush.msra.mxu0 0.0
    %791 = vmatpush.msra.mxu0 0.0
    %792 = vmatpush.msra.mxu0 0.0
    %793 = vmatpush.msra.mxu0 0.0
    %794 = vmatpush.msra.mxu0 0.0
    %795 = vmatpush.msra.mxu0 0.0
    %796 = vmatpush.msra.mxu0 0.0
    %797 = vmatpush.msra.mxu0 0.0
    %798 = vmatpush.msra.mxu0 0.0
    %v799 = vand.u32 %v99, 4294901760
    %800 = vmatpush.msra.mxu0 %v799
    %v801 = vand.u32 %v86, 4294901760
    %802 = vmatmul.f32.gmra.mxu0 %v801
    %v803 = vpop.f32.mrf.mxu0
    %v804 = vadd.f32 %v770, %v803
    %v805 = vand.u32 %v88, 4294901760
    %806 = vmatmul.f32.gmra.mxu0 %v805
    %v807 = vpop.f32.mrf.mxu0
    %v808 = vadd.f32 %v774, %v807
    %v809 = vand.u32 %v90, 4294901760
    %810 = vmatmul.f32.gmra.mxu0 %v809
    %v811 = vpop.f32.mrf.mxu0
    %v812 = vadd.f32 %v778, %v811
    %v813 = vand.u32 %v92, 4294901760
    %814 = vmatmul.f32.gmra.mxu0 %v813
    %v815 = vpop.f32.mrf.mxu0
    %v816 = vadd.f32 %v782, %v815
    %817 = vdwg.mxu0
    %v818 = vtanh.pop %v326
    %v819 = vtanh.pop %v565
    %v820 = vtanh.pop %v804
    %v821 = vtanh.pop %v330
    %v822 = vtanh.pop %v569
    %v823 = vtanh.pop %v808
    %v824 = vtanh.pop %v334
    %v825 = vtanh.pop %v573
    %v826 = vtanh.pop %v812
    %v827 = vtanh.pop %v338
    %v828 = vtanh.pop %v577
    %v829 = vtanh.pop %v816
    %v830 = vld [vmem:[%s2] sm:$0xff]
    %v831 = vld [vmem:[%s2 + $0x8] sm:$0xff]
    %v832 = vld [vmem:[%s2 + $0x10] sm:$0xff]
    %v833 = vld [vmem:[%s2 + $0x18] sm:$0xff]
    %835 = vset.pattern.permute.xlu0 32
    %836 = vperm.xlu0 %835, %v830
    %v837 = vpop.permute.xlu0 %836
    %840 = vset.pattern.permute.xlu0 32
    %841 = vperm.xlu0 %840, %v831
    %v842 = vpop.permute.xlu0 %841
    %845 = vset.pattern.permute.xlu0 32
    %846 = vperm.xlu0 %845, %v832
    %v847 = vpop.permute.xlu0 %846
    %850 = vset.pattern.permute.xlu0 32
    %851 = vperm.xlu0 %850, %v833
    %v852 = vpop.permute.xlu0 %851
    %vm854 = vcmask 261120
    %v855 = vsel %vm854, %v830, 0
    %v857 = vsel %vm854, %v831, 0
    %v859 = vsel %vm854, %v832, 0
    %v861 = vsel %vm854, %v833, 0
    %863 = vmatpush.msra.mxu0 0.0
    %864 = vmatpush.msra.mxu0 0.0
    %865 = vmatpush.msra.mxu0 0.0
    %866 = vmatpush.msra.mxu0 0.0
    %867 = vmatpush.msra.mxu0 0.0
    %868 = vmatpush.msra.mxu0 0.0
    %869 = vmatpush.msra.mxu0 0.0
    %870 = vmatpush.msra.mxu0 0.0
    %871 = vmatpush.msra.mxu0 0.0
    %872 = vmatpush.msra.mxu0 0.0
    %873 = vmatpush.msra.mxu0 0.0
    %874 = vmatpush.msra.mxu0 0.0
    %v875 = vand.u32 %v827, 4294901760
    %876 = vmatpush.msra.mxu0 %v875
    %v877 = vand.u32 %v824, 4294901760
    %878 = vmatpush.msra.mxu0 %v877
    %v879 = vand.u32 %v821, 4294901760
    %880 = vmatpush.msra.mxu0 %v879
    %v881 = vand.u32 %v818, 4294901760
    %882 = vmatpush.msra.mxu0 %v881
    %v883 = vand.u32 %v855, 4294901760
    %v884 = vsub.f32 %v855, %v883
    %v885 = vand.u32 %v884, 4294901760
    %v886 = vsub.f32 %v884, %v885
    %v887 = vand.u32 %v886, 4294901760
    %888 = vmatmul.f32.gmra.mxu0 %v887
    %v889 = vpop.f32.mrf.mxu0
    %v890 = vadd.f32 %v837, %v889
    %v891 = vand.u32 %v857, 4294901760
    %v892 = vsub.f32 %v857, %v891
    %v893 = vand.u32 %v892, 4294901760
    %v894 = vsub.f32 %v892, %v893
    %v895 = vand.u32 %v894, 4294901760
    %896 = vmatmul.f32.gmra.mxu0 %v895
    %v897 = vpop.f32.mrf.mxu0
    %v898 = vadd.f32 %v842, %v897
    %v899 = vand.u32 %v859, 4294901760
    %v900 = vsub.f32 %v859, %v899
    %v901 = vand.u32 %v900, 4294901760
    %v902 = vsub.f32 %v900, %v901
    %v903 = vand.u32 %v902, 4294901760
    %904 = vmatmul.f32.gmra.mxu0 %v903
    %v905 = vpop.f32.mrf.mxu0
    %v906 = vadd.f32 %v847, %v905
    %v907 = vand.u32 %v861, 4294901760
    %v908 = vsub.f32 %v861, %v907
    %v909 = vand.u32 %v908, 4294901760
    %v910 = vsub.f32 %v908, %v909
    %v911 = vand.u32 %v910, 4294901760
    %912 = vmatmul.f32.gmra.mxu0 %v911
    %v913 = vpop.f32.mrf.mxu0
    %v914 = vadd.f32 %v852, %v913
    %915 = vdwg.mxu0
    %916 = vmatpush.msra.mxu0 0.0
    %917 = vmatpush.msra.mxu0 0.0
    %918 = vmatpush.msra.mxu0 0.0
    %919 = vmatpush.msra.mxu0 0.0
    %920 = vmatpush.msra.mxu0 0.0
    %921 = vmatpush.msra.mxu0 0.0
    %922 = vmatpush.msra.mxu0 0.0
    %923 = vmatpush.msra.mxu0 0.0
    %924 = vmatpush.msra.mxu0 0.0
    %925 = vmatpush.msra.mxu0 0.0
    %926 = vmatpush.msra.mxu0 0.0
    %927 = vmatpush.msra.mxu0 0.0
    %v928 = vand.u32 %v827, 4294901760
    %v929 = vsub.f32 %v827, %v928
    %v930 = vand.u32 %v929, 4294901760
    %v931 = vsub.f32 %v929, %v930
    %v932 = vand.u32 %v931, 4294901760
    %933 = vmatpush.msra.mxu0 %v932
    %v934 = vand.u32 %v824, 4294901760
    %v935 = vsub.f32 %v824, %v934
    %v936 = vand.u32 %v935, 4294901760
    %v937 = vsub.f32 %v935, %v936
    %v938 = vand.u32 %v937, 4294901760
    %939 = vmatpush.msra.mxu0 %v938
    %v940 = vand.u32 %v821, 4294901760
    %v941 = vsub.f32 %v821, %v940
    %v942 = vand.u32 %v941, 4294901760
    %v943 = vsub.f32 %v941, %v942
    %v944 = vand.u32 %v943, 4294901760
    %945 = vmatpush.msra.mxu0 %v944
    %v946 = vand.u32 %v818, 4294901760
    %v947 = vsub.f32 %v818, %v946
    %v948 = vand.u32 %v947, 4294901760
    %v949 = vsub.f32 %v947, %v948
    %v950 = vand.u32 %v949, 4294901760
    %951 = vmatpush.msra.mxu0 %v950
    %v952 = vand.u32 %v855, 4294901760
    %953 = vmatmul.f32.gmra.mxu0 %v952
    %v954 = vpop.f32.mrf.mxu0
    %v955 = vadd.f32 %v890, %v954
    %v956 = vand.u32 %v857, 4294901760
    %957 = vmatmul.f32.gmra.mxu0 %v956
    %v958 = vpop.f32.mrf.mxu0
    %v959 = vadd.f32 %v898, %v958
    %v960 = vand.u32 %v859, 4294901760
    %961 = vmatmul.f32.gmra.mxu0 %v960
    %v962 = vpop.f32.mrf.mxu0
    %v963 = vadd.f32 %v906, %v962
    %v964 = vand.u32 %v861, 4294901760
    %965 = vmatmul.f32.gmra.mxu0 %v964
    %v966 = vpop.f32.mrf.mxu0
    %v967 = vadd.f32 %v914, %v966
    %968 = vdwg.mxu0
    %969 = vmatpush.msra.mxu0 0.0
    %970 = vmatpush.msra.mxu0 0.0
    %971 = vmatpush.msra.mxu0 0.0
    %972 = vmatpush.msra.mxu0 0.0
    %973 = vmatpush.msra.mxu0 0.0
    %974 = vmatpush.msra.mxu0 0.0
    %975 = vmatpush.msra.mxu0 0.0
    %976 = vmatpush.msra.mxu0 0.0
    %977 = vmatpush.msra.mxu0 0.0
    %978 = vmatpush.msra.mxu0 0.0
    %979 = vmatpush.msra.mxu0 0.0
    %980 = vmatpush.msra.mxu0 0.0
    %v981 = vand.u32 %v827, 4294901760
    %v982 = vsub.f32 %v827, %v981
    %983 = vmatpush.msra.mxu0 %v982
    %v984 = vand.u32 %v824, 4294901760
    %v985 = vsub.f32 %v824, %v984
    %986 = vmatpush.msra.mxu0 %v985
    %v987 = vand.u32 %v821, 4294901760
    %v988 = vsub.f32 %v821, %v987
    %989 = vmatpush.msra.mxu0 %v988
    %v990 = vand.u32 %v818, 4294901760
    %v991 = vsub.f32 %v818, %v990
    %992 = vmatpush.msra.mxu0 %v991
    %v993 = vand.u32 %v855, 4294901760
    %v994 = vsub.f32 %v855, %v993
    %995 = vmatmul.f32.gmra.mxu0 %v994
    %v996 = vpop.f32.mrf.mxu0
    %v997 = vadd.f32 %v955, %v996
    %v998 = vand.u32 %v857, 4294901760
    %v999 = vsub.f32 %v857, %v998
    %1000 = vmatmul.f32.gmra.mxu0 %v999
    %v1001 = vpop.f32.mrf.mxu0
    %v1002 = vadd.f32 %v959, %v1001
    %v1003 = vand.u32 %v859, 4294901760
    %v1004 = vsub.f32 %v859, %v1003
    %1005 = vmatmul.f32.gmra.mxu0 %v1004
    %v1006 = vpop.f32.mrf.mxu0
    %v1007 = vadd.f32 %v963, %v1006
    %v1008 = vand.u32 %v861, 4294901760
    %v1009 = vsub.f32 %v861, %v1008
    %1010 = vmatmul.f32.gmra.mxu0 %v1009
    %v1011 = vpop.f32.mrf.mxu0
    %v1012 = vadd.f32 %v967, %v1011
    %1013 = vdwg.mxu0
    %1014 = vmatpush.msra.mxu0 0.0
    %1015 = vmatpush.msra.mxu0 0.0
    %1016 = vmatpush.msra.mxu0 0.0
    %1017 = vmatpush.msra.mxu0 0.0
    %1018 = vmatpush.msra.mxu0 0.0
    %1019 = vmatpush.msra.mxu0 0.0
    %1020 = vmatpush.msra.mxu0 0.0
    %1021 = vmatpush.msra.mxu0 0.0
    %1022 = vmatpush.msra.mxu0 0.0
    %1023 = vmatpush.msra.mxu0 0.0
    %1024 = vmatpush.msra.mxu0 0.0
    %1025 = vmatpush.msra.mxu0 0.0
    %v1026 = vand.u32 %v827, 4294901760
    %1027 = vmatpush.msra.mxu0 %v1026
    %v1028 = vand.u32 %v824, 4294901760
    %1029 = vmatpush.msra.mxu0 %v1028
    %v1030 = vand.u32 %v821, 4294901760
    %1031 = vmatpush.msra.mxu0 %v1030
    %v1032 = vand.u32 %v818, 4294901760
    %1033 = vmatpush.msra.mxu0 %v1032
    %v1034 = vand.u32 %v855, 4294901760
    %v1035 = vsub.f32 %v855, %v1034
    %v1036 = vand.u32 %v1035, 4294901760
    %1037 = vmatmul.f32.gmra.mxu0 %v1036
    %v1038 = vpop.f32.mrf.mxu0
    %v1039 = vadd.f32 %v997, %v1038
    %v1040 = vand.u32 %v857, 4294901760
    %v1041 = vsub.f32 %v857, %v1040
    %v1042 = vand.u32 %v1041, 4294901760
    %1043 = vmatmul.f32.gmra.mxu0 %v1042
    %v1044 = vpop.f32.mrf.mxu0
    %v1045 = vadd.f32 %v1002, %v1044
    %v1046 = vand.u32 %v859, 4294901760
    %v1047 = vsub.f32 %v859, %v1046
    %v1048 = vand.u32 %v1047, 4294901760
    %1049 = vmatmul.f32.gmra.mxu0 %v1048
    %v1050 = vpop.f32.mrf.mxu0
    %v1051 = vadd.f32 %v1007, %v1050
    %v1052 = vand.u32 %v861, 4294901760
    %v1053 = vsub.f32 %v861, %v1052
    %v1054 = vand.u32 %v1053, 4294901760
    %1055 = vmatmul.f32.gmra.mxu0 %v1054
    %v1056 = vpop.f32.mrf.mxu0
    %v1057 = vadd.f32 %v1012, %v1056
    %1058 = vdwg.mxu0
    %1059 = vmatpush.msra.mxu0 0.0
    %1060 = vmatpush.msra.mxu0 0.0
    %1061 = vmatpush.msra.mxu0 0.0
    %1062 = vmatpush.msra.mxu0 0.0
    %1063 = vmatpush.msra.mxu0 0.0
    %1064 = vmatpush.msra.mxu0 0.0
    %1065 = vmatpush.msra.mxu0 0.0
    %1066 = vmatpush.msra.mxu0 0.0
    %1067 = vmatpush.msra.mxu0 0.0
    %1068 = vmatpush.msra.mxu0 0.0
    %1069 = vmatpush.msra.mxu0 0.0
    %1070 = vmatpush.msra.mxu0 0.0
    %v1071 = vand.u32 %v827, 4294901760
    %v1072 = vsub.f32 %v827, %v1071
    %v1073 = vand.u32 %v1072, 4294901760
    %1074 = vmatpush.msra.mxu0 %v1073
    %v1075 = vand.u32 %v824, 4294901760
    %v1076 = vsub.f32 %v824, %v1075
    %v1077 = vand.u32 %v1076, 4294901760
    %1078 = vmatpush.msra.mxu0 %v1077
    %v1079 = vand.u32 %v821, 4294901760
    %v1080 = vsub.f32 %v821, %v1079
    %v1081 = vand.u32 %v1080, 4294901760
    %1082 = vmatpush.msra.mxu0 %v1081
    %v1083 = vand.u32 %v818, 4294901760
    %v1084 = vsub.f32 %v818, %v1083
    %v1085 = vand.u32 %v1084, 4294901760
    %1086 = vmatpush.msra.mxu0 %v1085
    %v1087 = vand.u32 %v855, 4294901760
    %1088 = vmatmul.f32.gmra.mxu0 %v1087
    %v1089 = vpop.f32.mrf.mxu0
    %v1090 = vadd.f32 %v1039, %v1089
    %v1091 = vand.u32 %v857, 4294901760
    %1092 = vmatmul.f32.gmra.mxu0 %v1091
    %v1093 = vpop.f32.mrf.mxu0
    %v1094 = vadd.f32 %v1045, %v1093
    %v1095 = vand.u32 %v859, 4294901760
    %1096 = vmatmul.f32.gmra.mxu0 %v1095
    %v1097 = vpop.f32.mrf.mxu0
    %v1098 = vadd.f32 %v1051, %v1097
    %v1099 = vand.u32 %v861, 4294901760
    %1100 = vmatmul.f32.gmra.mxu0 %v1099
    %v1101 = vpop.f32.mrf.mxu0
    %v1102 = vadd.f32 %v1057, %v1101
    %1103 = vdwg.mxu0
    %1104 = vmatpush.msra.mxu0 0.0
    %1105 = vmatpush.msra.mxu0 0.0
    %1106 = vmatpush.msra.mxu0 0.0
    %1107 = vmatpush.msra.mxu0 0.0
    %1108 = vmatpush.msra.mxu0 0.0
    %1109 = vmatpush.msra.mxu0 0.0
    %1110 = vmatpush.msra.mxu0 0.0
    %1111 = vmatpush.msra.mxu0 0.0
    %1112 = vmatpush.msra.mxu0 0.0
    %1113 = vmatpush.msra.mxu0 0.0
    %1114 = vmatpush.msra.mxu0 0.0
    %1115 = vmatpush.msra.mxu0 0.0
    %v1116 = vand.u32 %v827, 4294901760
    %1117 = vmatpush.msra.mxu0 %v1116
    %v1118 = vand.u32 %v824, 4294901760
    %1119 = vmatpush.msra.mxu0 %v1118
    %v1120 = vand.u32 %v821, 4294901760
    %1121 = vmatpush.msra.mxu0 %v1120
    %v1122 = vand.u32 %v818, 4294901760
    %1123 = vmatpush.msra.mxu0 %v1122
    %v1124 = vand.u32 %v855, 4294901760
    %1125 = vmatmul.f32.gmra.mxu0 %v1124
    %v1126 = vpop.f32.mrf.mxu0
    %v1127 = vadd.f32 %v1090, %v1126
    %v1128 = vand.u32 %v857, 4294901760
    %1129 = vmatmul.f32.gmra.mxu0 %v1128
    %v1130 = vpop.f32.mrf.mxu0
    %v1131 = vadd.f32 %v1094, %v1130
    %v1132 = vand.u32 %v859, 4294901760
    %1133 = vmatmul.f32.gmra.mxu0 %v1132
    %v1134 = vpop.f32.mrf.mxu0
    %v1135 = vadd.f32 %v1098, %v1134
    %v1136 = vand.u32 %v861, 4294901760
    %1137 = vmatmul.f32.gmra.mxu0 %v1136
    %v1138 = vpop.f32.mrf.mxu0
    %v1139 = vadd.f32 %v1102, %v1138
    %1140 = vdwg.mxu0
    %1141 = vmatpush.msra.mxu0 0.0
    %1142 = vmatpush.msra.mxu0 0.0
    %1143 = vmatpush.msra.mxu0 0.0
    %1144 = vmatpush.msra.mxu0 0.0
    %1145 = vmatpush.msra.mxu0 0.0
    %1146 = vmatpush.msra.mxu0 0.0
    %1147 = vmatpush.msra.mxu0 0.0
    %1148 = vmatpush.msra.mxu0 0.0
    %1149 = vmatpush.msra.mxu0 0.0
    %1150 = vmatpush.msra.mxu0 0.0
    %1151 = vmatpush.msra.mxu0 0.0
    %1152 = vmatpush.msra.mxu0 0.0
    %v1153 = vand.u32 %v828, 4294901760
    %1154 = vmatpush.msra.mxu0 %v1153
    %v1155 = vand.u32 %v825, 4294901760
    %1156 = vmatpush.msra.mxu0 %v1155
    %v1157 = vand.u32 %v822, 4294901760
    %1158 = vmatpush.msra.mxu0 %v1157
    %v1159 = vand.u32 %v819, 4294901760
    %1160 = vmatpush.msra.mxu0 %v1159
    %v1161 = vand.u32 %v855, 4294901760
    %v1162 = vsub.f32 %v855, %v1161
    %v1163 = vand.u32 %v1162, 4294901760
    %v1164 = vsub.f32 %v1162, %v1163
    %v1165 = vand.u32 %v1164, 4294901760
    %1166 = vmatmul.f32.gmra.mxu0 %v1165
    %v1167 = vpop.f32.mrf.mxu0
    %v1168 = vadd.f32 %v837, %v1167
    %v1169 = vand.u32 %v857, 4294901760
    %v1170 = vsub.f32 %v857, %v1169
    %v1171 = vand.u32 %v1170, 4294901760
    %v1172 = vsub.f32 %v1170, %v1171
    %v1173 = vand.u32 %v1172, 4294901760
    %1174 = vmatmul.f32.gmra.mxu0 %v1173
    %v1175 = vpop.f32.mrf.mxu0
    %v1176 = vadd.f32 %v842, %v1175
    %v1177 = vand.u32 %v859, 4294901760
    %v1178 = vsub.f32 %v859, %v1177
    %v1179 = vand.u32 %v1178, 4294901760
    %v1180 = vsub.f32 %v1178, %v1179
    %v1181 = vand.u32 %v1180, 4294901760
    %1182 = vmatmul.f32.gmra.mxu0 %v1181
    %v1183 = vpop.f32.mrf.mxu0
    %v1184 = vadd.f32 %v847, %v1183
    %v1185 = vand.u32 %v861, 4294901760
    %v1186 = vsub.f32 %v861, %v1185
    %v1187 = vand.u32 %v1186, 4294901760
    %v1188 = vsub.f32 %v1186, %v1187
    %v1189 = vand.u32 %v1188, 4294901760
    %1190 = vmatmul.f32.gmra.mxu0 %v1189
    %v1191 = vpop.f32.mrf.mxu0
    %v1192 = vadd.f32 %v852, %v1191
    %1193 = vdwg.mxu0
    %1194 = vmatpush.msra.mxu0 0.0
    %1195 = vmatpush.msra.mxu0 0.0
    %1196 = vmatpush.msra.mxu0 0.0
    %1197 = vmatpush.msra.mxu0 0.0
    %1198 = vmatpush.msra.mxu0 0.0
    %1199 = vmatpush.msra.mxu0 0.0
    %1200 = vmatpush.msra.mxu0 0.0
    %1201 = vmatpush.msra.mxu0 0.0
    %1202 = vmatpush.msra.mxu0 0.0
    %1203 = vmatpush.msra.mxu0 0.0
    %1204 = vmatpush.msra.mxu0 0.0
    %1205 = vmatpush.msra.mxu0 0.0
    %v1206 = vand.u32 %v828, 4294901760
    %v1207 = vsub.f32 %v828, %v1206
    %v1208 = vand.u32 %v1207, 4294901760
    %v1209 = vsub.f32 %v1207, %v1208
    %v1210 = vand.u32 %v1209, 4294901760
    %1211 = vmatpush.msra.mxu0 %v1210
    %v1212 = vand.u32 %v825, 4294901760
    %v1213 = vsub.f32 %v825, %v1212
    %v1214 = vand.u32 %v1213, 4294901760
    %v1215 = vsub.f32 %v1213, %v1214
    %v1216 = vand.u32 %v1215, 4294901760
    %1217 = vmatpush.msra.mxu0 %v1216
    %v1218 = vand.u32 %v822, 4294901760
    %v1219 = vsub.f32 %v822, %v1218
    %v1220 = vand.u32 %v1219, 4294901760
    %v1221 = vsub.f32 %v1219, %v1220
    %v1222 = vand.u32 %v1221, 4294901760
    %1223 = vmatpush.msra.mxu0 %v1222
    %v1224 = vand.u32 %v819, 4294901760
    %v1225 = vsub.f32 %v819, %v1224
    %v1226 = vand.u32 %v1225, 4294901760
    %v1227 = vsub.f32 %v1225, %v1226
    %v1228 = vand.u32 %v1227, 4294901760
    %1229 = vmatpush.msra.mxu0 %v1228
    %v1230 = vand.u32 %v855, 4294901760
    %1231 = vmatmul.f32.gmra.mxu0 %v1230
    %v1232 = vpop.f32.mrf.mxu0
    %v1233 = vadd.f32 %v1168, %v1232
    %v1234 = vand.u32 %v857, 4294901760
    %1235 = vmatmul.f32.gmra.mxu0 %v1234
    %v1236 = vpop.f32.mrf.mxu0
    %v1237 = vadd.f32 %v1176, %v1236
    %v1238 = vand.u32 %v859, 4294901760
    %1239 = vmatmul.f32.gmra.mxu0 %v1238
    %v1240 = vpop.f32.mrf.mxu0
    %v1241 = vadd.f32 %v1184, %v1240
    %v1242 = vand.u32 %v861, 4294901760
    %1243 = vmatmul.f32.gmra.mxu0 %v1242
    %v1244 = vpop.f32.mrf.mxu0
    %v1245 = vadd.f32 %v1192, %v1244
    %1246 = vdwg.mxu0
    %1247 = vmatpush.msra.mxu0 0.0
    %1248 = vmatpush.msra.mxu0 0.0
    %1249 = vmatpush.msra.mxu0 0.0
    %1250 = vmatpush.msra.mxu0 0.0
    %1251 = vmatpush.msra.mxu0 0.0
    %1252 = vmatpush.msra.mxu0 0.0
    %1253 = vmatpush.msra.mxu0 0.0
    %1254 = vmatpush.msra.mxu0 0.0
    %1255 = vmatpush.msra.mxu0 0.0
    %1256 = vmatpush.msra.mxu0 0.0
    %1257 = vmatpush.msra.mxu0 0.0
    %1258 = vmatpush.msra.mxu0 0.0
    %v1259 = vand.u32 %v828, 4294901760
    %v1260 = vsub.f32 %v828, %v1259
    %1261 = vmatpush.msra.mxu0 %v1260
    %v1262 = vand.u32 %v825, 4294901760
    %v1263 = vsub.f32 %v825, %v1262
    %1264 = vmatpush.msra.mxu0 %v1263
    %v1265 = vand.u32 %v822, 4294901760
    %v1266 = vsub.f32 %v822, %v1265
    %1267 = vmatpush.msra.mxu0 %v1266
    %v1268 = vand.u32 %v819, 4294901760
    %v1269 = vsub.f32 %v819, %v1268
    %1270 = vmatpush.msra.mxu0 %v1269
    %v1271 = vand.u32 %v855, 4294901760
    %v1272 = vsub.f32 %v855, %v1271
    %1273 = vmatmul.f32.gmra.mxu0 %v1272
    %v1274 = vpop.f32.mrf.mxu0
    %v1275 = vadd.f32 %v1233, %v1274
    %v1276 = vand.u32 %v857, 4294901760
    %v1277 = vsub.f32 %v857, %v1276
    %1278 = vmatmul.f32.gmra.mxu0 %v1277
    %v1279 = vpop.f32.mrf.mxu0
    %v1280 = vadd.f32 %v1237, %v1279
    %v1281 = vand.u32 %v859, 4294901760
    %v1282 = vsub.f32 %v859, %v1281
    %1283 = vmatmul.f32.gmra.mxu0 %v1282
    %v1284 = vpop.f32.mrf.mxu0
    %v1285 = vadd.f32 %v1241, %v1284
    %v1286 = vand.u32 %v861, 4294901760
    %v1287 = vsub.f32 %v861, %v1286
    %1288 = vmatmul.f32.gmra.mxu0 %v1287
    %v1289 = vpop.f32.mrf.mxu0
    %v1290 = vadd.f32 %v1245, %v1289
    %1291 = vdwg.mxu0
    %1292 = vmatpush.msra.mxu0 0.0
    %1293 = vmatpush.msra.mxu0 0.0
    %1294 = vmatpush.msra.mxu0 0.0
    %1295 = vmatpush.msra.mxu0 0.0
    %1296 = vmatpush.msra.mxu0 0.0
    %1297 = vmatpush.msra.mxu0 0.0
    %1298 = vmatpush.msra.mxu0 0.0
    %1299 = vmatpush.msra.mxu0 0.0
    %1300 = vmatpush.msra.mxu0 0.0
    %1301 = vmatpush.msra.mxu0 0.0
    %1302 = vmatpush.msra.mxu0 0.0
    %1303 = vmatpush.msra.mxu0 0.0
    %v1304 = vand.u32 %v828, 4294901760
    %1305 = vmatpush.msra.mxu0 %v1304
    %v1306 = vand.u32 %v825, 4294901760
    %1307 = vmatpush.msra.mxu0 %v1306
    %v1308 = vand.u32 %v822, 4294901760
    %1309 = vmatpush.msra.mxu0 %v1308
    %v1310 = vand.u32 %v819, 4294901760
    %1311 = vmatpush.msra.mxu0 %v1310
    %v1312 = vand.u32 %v855, 4294901760
    %v1313 = vsub.f32 %v855, %v1312
    %v1314 = vand.u32 %v1313, 4294901760
    %1315 = vmatmul.f32.gmra.mxu0 %v1314
    %v1316 = vpop.f32.mrf.mxu0
    %v1317 = vadd.f32 %v1275, %v1316
    %v1318 = vand.u32 %v857, 4294901760
    %v1319 = vsub.f32 %v857, %v1318
    %v1320 = vand.u32 %v1319, 4294901760
    %1321 = vmatmul.f32.gmra.mxu0 %v1320
    %v1322 = vpop.f32.mrf.mxu0
    %v1323 = vadd.f32 %v1280, %v1322
    %v1324 = vand.u32 %v859, 4294901760
    %v1325 = vsub.f32 %v859, %v1324
    %v1326 = vand.u32 %v1325, 4294901760
    %1327 = vmatmul.f32.gmra.mxu0 %v1326
    %v1328 = vpop.f32.mrf.mxu0
    %v1329 = vadd.f32 %v1285, %v1328
    %v1330 = vand.u32 %v861, 4294901760
    %v1331 = vsub.f32 %v861, %v1330
    %v1332 = vand.u32 %v1331, 4294901760
    %1333 = vmatmul.f32.gmra.mxu0 %v1332
    %v1334 = vpop.f32.mrf.mxu0
    %v1335 = vadd.f32 %v1290, %v1334
    %1336 = vdwg.mxu0
    %1337 = vmatpush.msra.mxu0 0.0
    %1338 = vmatpush.msra.mxu0 0.0
    %1339 = vmatpush.msra.mxu0 0.0
    %1340 = vmatpush.msra.mxu0 0.0
    %1341 = vmatpush.msra.mxu0 0.0
    %1342 = vmatpush.msra.mxu0 0.0
    %1343 = vmatpush.msra.mxu0 0.0
    %1344 = vmatpush.msra.mxu0 0.0
    %1345 = vmatpush.msra.mxu0 0.0
    %1346 = vmatpush.msra.mxu0 0.0
    %1347 = vmatpush.msra.mxu0 0.0
    %1348 = vmatpush.msra.mxu0 0.0
    %v1349 = vand.u32 %v828, 4294901760
    %v1350 = vsub.f32 %v828, %v1349
    %v1351 = vand.u32 %v1350, 4294901760
    %1352 = vmatpush.msra.mxu0 %v1351
    %v1353 = vand.u32 %v825, 4294901760
    %v1354 = vsub.f32 %v825, %v1353
    %v1355 = vand.u32 %v1354, 4294901760
    %1356 = vmatpush.msra.mxu0 %v1355
    %v1357 = vand.u32 %v822, 4294901760
    %v1358 = vsub.f32 %v822, %v1357
    %v1359 = vand.u32 %v1358, 4294901760
    %1360 = vmatpush.msra.mxu0 %v1359
    %v1361 = vand.u32 %v819, 4294901760
    %v1362 = vsub.f32 %v819, %v1361
    %v1363 = vand.u32 %v1362, 4294901760
    %1364 = vmatpush.msra.mxu0 %v1363
    %v1365 = vand.u32 %v855, 4294901760
    %1366 = vmatmul.f32.gmra.mxu0 %v1365
    %v1367 = vpop.f32.mrf.mxu0
    %v1368 = vadd.f32 %v1317, %v1367
    %v1369 = vand.u32 %v857, 4294901760
    %1370 = vmatmul.f32.gmra.mxu0 %v1369
    %v1371 = vpop.f32.mrf.mxu0
    %v1372 = vadd.f32 %v1323, %v1371
    %v1373 = vand.u32 %v859, 4294901760
    %1374 = vmatmul.f32.gmra.mxu0 %v1373
    %v1375 = vpop.f32.mrf.mxu0
    %v1376 = vadd.f32 %v1329, %v1375
    %v1377 = vand.u32 %v861, 4294901760
    %1378 = vmatmul.f32.gmra.mxu0 %v1377
    %v1379 = vpop.f32.mrf.mxu0
    %v1380 = vadd.f32 %v1335, %v1379
    %1381 = vdwg.mxu0
    %1382 = vmatpush.msra.mxu0 0.0
    %1383 = vmatpush.msra.mxu0 0.0
    %1384 = vmatpush.msra.mxu0 0.0
    %1385 = vmatpush.msra.mxu0 0.0
    %1386 = vmatpush.msra.mxu0 0.0
    %1387 = vmatpush.msra.mxu0 0.0
    %1388 = vmatpush.msra.mxu0 0.0
    %1389 = vmatpush.msra.mxu0 0.0
    %1390 = vmatpush.msra.mxu0 0.0
    %1391 = vmatpush.msra.mxu0 0.0
    %1392 = vmatpush.msra.mxu0 0.0
    %1393 = vmatpush.msra.mxu0 0.0
    %v1394 = vand.u32 %v828, 4294901760
    %1395 = vmatpush.msra.mxu0 %v1394
    %v1396 = vand.u32 %v825, 4294901760
    %1397 = vmatpush.msra.mxu0 %v1396
    %v1398 = vand.u32 %v822, 4294901760
    %1399 = vmatpush.msra.mxu0 %v1398
    %v1400 = vand.u32 %v819, 4294901760
    %1401 = vmatpush.msra.mxu0 %v1400
    %v1402 = vand.u32 %v855, 4294901760
    %1403 = vmatmul.f32.gmra.mxu0 %v1402
    %v1404 = vpop.f32.mrf.mxu0
    %v1405 = vadd.f32 %v1368, %v1404
    %v1406 = vand.u32 %v857, 4294901760
    %1407 = vmatmul.f32.gmra.mxu0 %v1406
    %v1408 = vpop.f32.mrf.mxu0
    %v1409 = vadd.f32 %v1372, %v1408
    %v1410 = vand.u32 %v859, 4294901760
    %1411 = vmatmul.f32.gmra.mxu0 %v1410
    %v1412 = vpop.f32.mrf.mxu0
    %v1413 = vadd.f32 %v1376, %v1412
    %v1414 = vand.u32 %v861, 4294901760
    %1415 = vmatmul.f32.gmra.mxu0 %v1414
    %v1416 = vpop.f32.mrf.mxu0
    %v1417 = vadd.f32 %v1380, %v1416
    %1418 = vdwg.mxu0
    %1419 = vmatpush.msra.mxu0 0.0
    %1420 = vmatpush.msra.mxu0 0.0
    %1421 = vmatpush.msra.mxu0 0.0
    %1422 = vmatpush.msra.mxu0 0.0
    %1423 = vmatpush.msra.mxu0 0.0
    %1424 = vmatpush.msra.mxu0 0.0
    %1425 = vmatpush.msra.mxu0 0.0
    %1426 = vmatpush.msra.mxu0 0.0
    %1427 = vmatpush.msra.mxu0 0.0
    %1428 = vmatpush.msra.mxu0 0.0
    %1429 = vmatpush.msra.mxu0 0.0
    %1430 = vmatpush.msra.mxu0 0.0
    %v1431 = vand.u32 %v829, 4294901760
    %1432 = vmatpush.msra.mxu0 %v1431
    %v1433 = vand.u32 %v826, 4294901760
    %1434 = vmatpush.msra.mxu0 %v1433
    %v1435 = vand.u32 %v823, 4294901760
    %1436 = vmatpush.msra.mxu0 %v1435
    %v1437 = vand.u32 %v820, 4294901760
    %1438 = vmatpush.msra.mxu0 %v1437
    %v1439 = vand.u32 %v855, 4294901760
    %v1440 = vsub.f32 %v855, %v1439
    %v1441 = vand.u32 %v1440, 4294901760
    %v1442 = vsub.f32 %v1440, %v1441
    %v1443 = vand.u32 %v1442, 4294901760
    %1444 = vmatmul.f32.gmra.mxu0 %v1443
    %v1445 = vpop.f32.mrf.mxu0
    %v1446 = vadd.f32 %v837, %v1445
    %v1447 = vand.u32 %v857, 4294901760
    %v1448 = vsub.f32 %v857, %v1447
    %v1449 = vand.u32 %v1448, 4294901760
    %v1450 = vsub.f32 %v1448, %v1449
    %v1451 = vand.u32 %v1450, 4294901760
    %1452 = vmatmul.f32.gmra.mxu0 %v1451
    %v1453 = vpop.f32.mrf.mxu0
    %v1454 = vadd.f32 %v842, %v1453
    %v1455 = vand.u32 %v859, 4294901760
    %v1456 = vsub.f32 %v859, %v1455
    %v1457 = vand.u32 %v1456, 4294901760
    %v1458 = vsub.f32 %v1456, %v1457
    %v1459 = vand.u32 %v1458, 4294901760
    %1460 = vmatmul.f32.gmra.mxu0 %v1459
    %v1461 = vpop.f32.mrf.mxu0
    %v1462 = vadd.f32 %v847, %v1461
    %v1463 = vand.u32 %v861, 4294901760
    %v1464 = vsub.f32 %v861, %v1463
    %v1465 = vand.u32 %v1464, 4294901760
    %v1466 = vsub.f32 %v1464, %v1465
    %v1467 = vand.u32 %v1466, 4294901760
    %1468 = vmatmul.f32.gmra.mxu0 %v1467
    %v1469 = vpop.f32.mrf.mxu0
    %v1470 = vadd.f32 %v852, %v1469
    %1471 = vdwg.mxu0
    %1472 = vmatpush.msra.mxu0 0.0
    %1473 = vmatpush.msra.mxu0 0.0
    %1474 = vmatpush.msra.mxu0 0.0
    %1475 = vmatpush.msra.mxu0 0.0
    %1476 = vmatpush.msra.mxu0 0.0
    %1477 = vmatpush.msra.mxu0 0.0
    %1478 = vmatpush.msra.mxu0 0.0
    %1479 = vmatpush.msra.mxu0 0.0
    %1480 = vmatpush.msra.mxu0 0.0
    %1481 = vmatpush.msra.mxu0 0.0
    %1482 = vmatpush.msra.mxu0 0.0
    %1483 = vmatpush.msra.mxu0 0.0
    %v1484 = vand.u32 %v829, 4294901760
    %v1485 = vsub.f32 %v829, %v1484
    %v1486 = vand.u32 %v1485, 4294901760
    %v1487 = vsub.f32 %v1485, %v1486
    %v1488 = vand.u32 %v1487, 4294901760
    %1489 = vmatpush.msra.mxu0 %v1488
    %v1490 = vand.u32 %v826, 4294901760
    %v1491 = vsub.f32 %v826, %v1490
    %v1492 = vand.u32 %v1491, 4294901760
    %v1493 = vsub.f32 %v1491, %v1492
    %v1494 = vand.u32 %v1493, 4294901760
    %1495 = vmatpush.msra.mxu0 %v1494
    %v1496 = vand.u32 %v823, 4294901760
    %v1497 = vsub.f32 %v823, %v1496
    %v1498 = vand.u32 %v1497, 4294901760
    %v1499 = vsub.f32 %v1497, %v1498
    %v1500 = vand.u32 %v1499, 4294901760
    %1501 = vmatpush.msra.mxu0 %v1500
    %v1502 = vand.u32 %v820, 4294901760
    %v1503 = vsub.f32 %v820, %v1502
    %v1504 = vand.u32 %v1503, 4294901760
    %v1505 = vsub.f32 %v1503, %v1504
    %v1506 = vand.u32 %v1505, 4294901760
    %1507 = vmatpush.msra.mxu0 %v1506
    %v1508 = vand.u32 %v855, 4294901760
    %1509 = vmatmul.f32.gmra.mxu0 %v1508
    %v1510 = vpop.f32.mrf.mxu0
    %v1511 = vadd.f32 %v1446, %v1510
    %v1512 = vand.u32 %v857, 4294901760
    %1513 = vmatmul.f32.gmra.mxu0 %v1512
    %v1514 = vpop.f32.mrf.mxu0
    %v1515 = vadd.f32 %v1454, %v1514
    %v1516 = vand.u32 %v859, 4294901760
    %1517 = vmatmul.f32.gmra.mxu0 %v1516
    %v1518 = vpop.f32.mrf.mxu0
    %v1519 = vadd.f32 %v1462, %v1518
    %v1520 = vand.u32 %v861, 4294901760
    %1521 = vmatmul.f32.gmra.mxu0 %v1520
    %v1522 = vpop.f32.mrf.mxu0
    %v1523 = vadd.f32 %v1470, %v1522
    %1524 = vdwg.mxu0
    %1525 = vmatpush.msra.mxu0 0.0
    %1526 = vmatpush.msra.mxu0 0.0
    %1527 = vmatpush.msra.mxu0 0.0
    %1528 = vmatpush.msra.mxu0 0.0
    %1529 = vmatpush.msra.mxu0 0.0
    %1530 = vmatpush.msra.mxu0 0.0
    %1531 = vmatpush.msra.mxu0 0.0
    %1532 = vmatpush.msra.mxu0 0.0
    %1533 = vmatpush.msra.mxu0 0.0
    %1534 = vmatpush.msra.mxu0 0.0
    %1535 = vmatpush.msra.mxu0 0.0
    %1536 = vmatpush.msra.mxu0 0.0
    %v1537 = vand.u32 %v829, 4294901760
    %v1538 = vsub.f32 %v829, %v1537
    %1539 = vmatpush.msra.mxu0 %v1538
    %v1540 = vand.u32 %v826, 4294901760
    %v1541 = vsub.f32 %v826, %v1540
    %1542 = vmatpush.msra.mxu0 %v1541
    %v1543 = vand.u32 %v823, 4294901760
    %v1544 = vsub.f32 %v823, %v1543
    %1545 = vmatpush.msra.mxu0 %v1544
    %v1546 = vand.u32 %v820, 4294901760
    %v1547 = vsub.f32 %v820, %v1546
    %1548 = vmatpush.msra.mxu0 %v1547
    %v1549 = vand.u32 %v855, 4294901760
    %v1550 = vsub.f32 %v855, %v1549
    %1551 = vmatmul.f32.gmra.mxu0 %v1550
    %v1552 = vpop.f32.mrf.mxu0
    %v1553 = vadd.f32 %v1511, %v1552
    %v1554 = vand.u32 %v857, 4294901760
    %v1555 = vsub.f32 %v857, %v1554
    %1556 = vmatmul.f32.gmra.mxu0 %v1555
    %v1557 = vpop.f32.mrf.mxu0
    %v1558 = vadd.f32 %v1515, %v1557
    %v1559 = vand.u32 %v859, 4294901760
    %v1560 = vsub.f32 %v859, %v1559
    %1561 = vmatmul.f32.gmra.mxu0 %v1560
    %v1562 = vpop.f32.mrf.mxu0
    %v1563 = vadd.f32 %v1519, %v1562
    %v1564 = vand.u32 %v861, 4294901760
    %v1565 = vsub.f32 %v861, %v1564
    %1566 = vmatmul.f32.gmra.mxu0 %v1565
    %v1567 = vpop.f32.mrf.mxu0
    %v1568 = vadd.f32 %v1523, %v1567
    %1569 = vdwg.mxu0
    %1570 = vmatpush.msra.mxu0 0.0
    %1571 = vmatpush.msra.mxu0 0.0
    %1572 = vmatpush.msra.mxu0 0.0
    %1573 = vmatpush.msra.mxu0 0.0
    %1574 = vmatpush.msra.mxu0 0.0
    %1575 = vmatpush.msra.mxu0 0.0
    %1576 = vmatpush.msra.mxu0 0.0
    %1577 = vmatpush.msra.mxu0 0.0
    %1578 = vmatpush.msra.mxu0 0.0
    %1579 = vmatpush.msra.mxu0 0.0
    %1580 = vmatpush.msra.mxu0 0.0
    %1581 = vmatpush.msra.mxu0 0.0
    %v1582 = vand.u32 %v829, 4294901760
    %1583 = vmatpush.msra.mxu0 %v1582
    %v1584 = vand.u32 %v826, 4294901760
    %1585 = vmatpush.msra.mxu0 %v1584
    %v1586 = vand.u32 %v823, 4294901760
    %1587 = vmatpush.msra.mxu0 %v1586
    %v1588 = vand.u32 %v820, 4294901760
    %1589 = vmatpush.msra.mxu0 %v1588
    %v1590 = vand.u32 %v855, 4294901760
    %v1591 = vsub.f32 %v855, %v1590
    %v1592 = vand.u32 %v1591, 4294901760
    %1593 = vmatmul.f32.gmra.mxu0 %v1592
    %v1594 = vpop.f32.mrf.mxu0
    %v1595 = vadd.f32 %v1553, %v1594
    %v1596 = vand.u32 %v857, 4294901760
    %v1597 = vsub.f32 %v857, %v1596
    %v1598 = vand.u32 %v1597, 4294901760
    %1599 = vmatmul.f32.gmra.mxu0 %v1598
    %v1600 = vpop.f32.mrf.mxu0
    %v1601 = vadd.f32 %v1558, %v1600
    %v1602 = vand.u32 %v859, 4294901760
    %v1603 = vsub.f32 %v859, %v1602
    %v1604 = vand.u32 %v1603, 4294901760
    %1605 = vmatmul.f32.gmra.mxu0 %v1604
    %v1606 = vpop.f32.mrf.mxu0
    %v1607 = vadd.f32 %v1563, %v1606
    %v1608 = vand.u32 %v861, 4294901760
    %v1609 = vsub.f32 %v861, %v1608
    %v1610 = vand.u32 %v1609, 4294901760
    %1611 = vmatmul.f32.gmra.mxu0 %v1610
    %v1612 = vpop.f32.mrf.mxu0
    %v1613 = vadd.f32 %v1568, %v1612
    %1614 = vdwg.mxu0
    %1615 = vmatpush.msra.mxu0 0.0
    %1616 = vmatpush.msra.mxu0 0.0
    %1617 = vmatpush.msra.mxu0 0.0
    %1618 = vmatpush.msra.mxu0 0.0
    %1619 = vmatpush.msra.mxu0 0.0
    %1620 = vmatpush.msra.mxu0 0.0
    %1621 = vmatpush.msra.mxu0 0.0
    %1622 = vmatpush.msra.mxu0 0.0
    %1623 = vmatpush.msra.mxu0 0.0
    %1624 = vmatpush.msra.mxu0 0.0
    %1625 = vmatpush.msra.mxu0 0.0
    %1626 = vmatpush.msra.mxu0 0.0
    %v1627 = vand.u32 %v829, 4294901760
    %v1628 = vsub.f32 %v829, %v1627
    %v1629 = vand.u32 %v1628, 4294901760
    %1630 = vmatpush.msra.mxu0 %v1629
    %v1631 = vand.u32 %v826, 4294901760
    %v1632 = vsub.f32 %v826, %v1631
    %v1633 = vand.u32 %v1632, 4294901760
    %1634 = vmatpush.msra.mxu0 %v1633
    %v1635 = vand.u32 %v823, 4294901760
    %v1636 = vsub.f32 %v823, %v1635
    %v1637 = vand.u32 %v1636, 4294901760
    %1638 = vmatpush.msra.mxu0 %v1637
    %v1639 = vand.u32 %v820, 4294901760
    %v1640 = vsub.f32 %v820, %v1639
    %v1641 = vand.u32 %v1640, 4294901760
    %1642 = vmatpush.msra.mxu0 %v1641
    %v1643 = vand.u32 %v855, 4294901760
    %1644 = vmatmul.f32.gmra.mxu0 %v1643
    %v1645 = vpop.f32.mrf.mxu0
    %v1646 = vadd.f32 %v1595, %v1645
    %v1647 = vand.u32 %v857, 4294901760
    %1648 = vmatmul.f32.gmra.mxu0 %v1647
    %v1649 = vpop.f32.mrf.mxu0
    %v1650 = vadd.f32 %v1601, %v1649
    %v1651 = vand.u32 %v859, 4294901760
    %1652 = vmatmul.f32.gmra.mxu0 %v1651
    %v1653 = vpop.f32.mrf.mxu0
    %v1654 = vadd.f32 %v1607, %v1653
    %v1655 = vand.u32 %v861, 4294901760
    %1656 = vmatmul.f32.gmra.mxu0 %v1655
    %v1657 = vpop.f32.mrf.mxu0
    %v1658 = vadd.f32 %v1613, %v1657
    %1659 = vdwg.mxu0
    %1660 = vmatpush.msra.mxu0 0.0
    %1661 = vmatpush.msra.mxu0 0.0
    %1662 = vmatpush.msra.mxu0 0.0
    %1663 = vmatpush.msra.mxu0 0.0
    %1664 = vmatpush.msra.mxu0 0.0
    %1665 = vmatpush.msra.mxu0 0.0
    %1666 = vmatpush.msra.mxu0 0.0
    %1667 = vmatpush.msra.mxu0 0.0
    %1668 = vmatpush.msra.mxu0 0.0
    %1669 = vmatpush.msra.mxu0 0.0
    %1670 = vmatpush.msra.mxu0 0.0
    %1671 = vmatpush.msra.mxu0 0.0
    %v1672 = vand.u32 %v829, 4294901760
    %1673 = vmatpush.msra.mxu0 %v1672
    %v1674 = vand.u32 %v826, 4294901760
    %1675 = vmatpush.msra.mxu0 %v1674
    %v1676 = vand.u32 %v823, 4294901760
    %1677 = vmatpush.msra.mxu0 %v1676
    %v1678 = vand.u32 %v820, 4294901760
    %1679 = vmatpush.msra.mxu0 %v1678
    %v1680 = vand.u32 %v855, 4294901760
    %1681 = vmatmul.f32.gmra.mxu0 %v1680
    %v1682 = vpop.f32.mrf.mxu0
    %v1683 = vadd.f32 %v1646, %v1682
    %v1684 = vand.u32 %v857, 4294901760
    %1685 = vmatmul.f32.gmra.mxu0 %v1684
    %v1686 = vpop.f32.mrf.mxu0
    %v1687 = vadd.f32 %v1650, %v1686
    %v1688 = vand.u32 %v859, 4294901760
    %1689 = vmatmul.f32.gmra.mxu0 %v1688
    %v1690 = vpop.f32.mrf.mxu0
    %v1691 = vadd.f32 %v1654, %v1690
    %v1692 = vand.u32 %v861, 4294901760
    %1693 = vmatmul.f32.gmra.mxu0 %v1692
    %v1694 = vpop.f32.mrf.mxu0
    %v1695 = vadd.f32 %v1658, %v1694
    %1696 = vdwg.mxu0
    %v1697 = vtanh.pop %v1127
    %v1698 = vtanh.pop %v1405
    %v1699 = vtanh.pop %v1683
    %v1700 = vtanh.pop %v1131
    %v1701 = vtanh.pop %v1409
    %v1702 = vtanh.pop %v1687
    %v1703 = vtanh.pop %v1135
    %v1704 = vtanh.pop %v1413
    %v1705 = vtanh.pop %v1691
    %v1706 = vtanh.pop %v1139
    %v1707 = vtanh.pop %v1417
    %v1708 = vtanh.pop %v1695
    %v1709 = vld [vmem:[#allocation5] sm:$0xff]
    %v1710 = vld [vmem:[#allocation5 + $0x8] sm:$0xff]
    %v1711 = vld [vmem:[#allocation5 + $0x10] sm:$0xff]
    %v1712 = vld [vmem:[#allocation5 + $0x18] sm:$0xff]
    %1714 = vset.pattern.permute.xlu0 32
    %1715 = vperm.xlu0 %1714, %v1709
    %v1716 = vpop.permute.xlu0 %1715
    %1719 = vset.pattern.permute.xlu0 32
    %1720 = vperm.xlu0 %1719, %v1710
    %v1721 = vpop.permute.xlu0 %1720
    %1724 = vset.pattern.permute.xlu0 32
    %1725 = vperm.xlu0 %1724, %v1711
    %v1726 = vpop.permute.xlu0 %1725
    %1729 = vset.pattern.permute.xlu0 32
    %1730 = vperm.xlu0 %1729, %v1712
    %v1731 = vpop.permute.xlu0 %1730
    %v1733 = vsel %vm854, %v1709, 0
    %v1735 = vsel %vm854, %v1710, 0
    %v1737 = vsel %vm854, %v1711, 0
    %v1739 = vsel %vm854, %v1712, 0
    %1741 = vmatpush.msra.mxu0 0.0
    %1742 = vmatpush.msra.mxu0 0.0
    %1743 = vmatpush.msra.mxu0 0.0
    %1744 = vmatpush.msra.mxu0 0.0
    %1745 = vmatpush.msra.mxu0 0.0
    %1746 = vmatpush.msra.mxu0 0.0
    %1747 = vmatpush.msra.mxu0 0.0
    %1748 = vmatpush.msra.mxu0 0.0
    %1749 = vmatpush.msra.mxu0 0.0
    %1750 = vmatpush.msra.mxu0 0.0
    %1751 = vmatpush.msra.mxu0 0.0
    %1752 = vmatpush.msra.mxu0 0.0
    %v1753 = vand.u32 %v1706, 4294901760
    %1754 = vmatpush.msra.mxu0 %v1753
    %v1755 = vand.u32 %v1703, 4294901760
    %1756 = vmatpush.msra.mxu0 %v1755
    %v1757 = vand.u32 %v1700, 4294901760
    %1758 = vmatpush.msra.mxu0 %v1757
    %v1759 = vand.u32 %v1697, 4294901760
    %1760 = vmatpush.msra.mxu0 %v1759
    %v1761 = vand.u32 %v1733, 4294901760
    %v1762 = vsub.f32 %v1733, %v1761
    %v1763 = vand.u32 %v1762, 4294901760
    %v1764 = vsub.f32 %v1762, %v1763
    %v1765 = vand.u32 %v1764, 4294901760
    %1766 = vmatmul.f32.gmra.mxu0 %v1765
    %v1767 = vpop.f32.mrf.mxu0
    %v1768 = vadd.f32 %v1716, %v1767
    %v1769 = vand.u32 %v1735, 4294901760
    %v1770 = vsub.f32 %v1735, %v1769
    %v1771 = vand.u32 %v1770, 4294901760
    %v1772 = vsub.f32 %v1770, %v1771
    %v1773 = vand.u32 %v1772, 4294901760
    %1774 = vmatmul.f32.gmra.mxu0 %v1773
    %v1775 = vpop.f32.mrf.mxu0
    %v1776 = vadd.f32 %v1721, %v1775
    %v1777 = vand.u32 %v1737, 4294901760
    %v1778 = vsub.f32 %v1737, %v1777
    %v1779 = vand.u32 %v1778, 4294901760
    %v1780 = vsub.f32 %v1778, %v1779
    %v1781 = vand.u32 %v1780, 4294901760
    %1782 = vmatmul.f32.gmra.mxu0 %v1781
    %v1783 = vpop.f32.mrf.mxu0
    %v1784 = vadd.f32 %v1726, %v1783
    %v1785 = vand.u32 %v1739, 4294901760
    %v1786 = vsub.f32 %v1739, %v1785
    %v1787 = vand.u32 %v1786, 4294901760
    %v1788 = vsub.f32 %v1786, %v1787
    %v1789 = vand.u32 %v1788, 4294901760
    %1790 = vmatmul.f32.gmra.mxu0 %v1789
    %v1791 = vpop.f32.mrf.mxu0
    %v1792 = vadd.f32 %v1731, %v1791
    %1793 = vdwg.mxu0
    %1794 = vmatpush.msra.mxu0 0.0
    %1795 = vmatpush.msra.mxu0 0.0
    %1796 = vmatpush.msra.mxu0 0.0
    %1797 = vmatpush.msra.mxu0 0.0
    %1798 = vmatpush.msra.mxu0 0.0
    %1799 = vmatpush.msra.mxu0 0.0
    %1800 = vmatpush.msra.mxu0 0.0
    %1801 = vmatpush.msra.mxu0 0.0
    %1802 = vmatpush.msra.mxu0 0.0
    %1803 = vmatpush.msra.mxu0 0.0
    %1804 = vmatpush.msra.mxu0 0.0
    %1805 = vmatpush.msra.mxu0 0.0
    %v1806 = vand.u32 %v1706, 4294901760
    %v1807 = vsub.f32 %v1706, %v1806
    %v1808 = vand.u32 %v1807, 4294901760
    %v1809 = vsub.f32 %v1807, %v1808
    %v1810 = vand.u32 %v1809, 4294901760
    %1811 = vmatpush.msra.mxu0 %v1810
    %v1812 = vand.u32 %v1703, 4294901760
    %v1813 = vsub.f32 %v1703, %v1812
    %v1814 = vand.u32 %v1813, 4294901760
    %v1815 = vsub.f32 %v1813, %v1814
    %v1816 = vand.u32 %v1815, 4294901760
    %1817 = vmatpush.msra.mxu0 %v1816
    %v1818 = vand.u32 %v1700, 4294901760
    %v1819 = vsub.f32 %v1700, %v1818
    %v1820 = vand.u32 %v1819, 4294901760
    %v1821 = vsub.f32 %v1819, %v1820
    %v1822 = vand.u32 %v1821, 4294901760
    %1823 = vmatpush.msra.mxu0 %v1822
    %v1824 = vand.u32 %v1697, 4294901760
    %v1825 = vsub.f32 %v1697, %v1824
    %v1826 = vand.u32 %v1825, 4294901760
    %v1827 = vsub.f32 %v1825, %v1826
    %v1828 = vand.u32 %v1827, 4294901760
    %1829 = vmatpush.msra.mxu0 %v1828
    %v1830 = vand.u32 %v1733, 4294901760
    %1831 = vmatmul.f32.gmra.mxu0 %v1830
    %v1832 = vpop.f32.mrf.mxu0
    %v1833 = vadd.f32 %v1768, %v1832
    %v1834 = vand.u32 %v1735, 4294901760
    %1835 = vmatmul.f32.gmra.mxu0 %v1834
    %v1836 = vpop.f32.mrf.mxu0
    %v1837 = vadd.f32 %v1776, %v1836
    %v1838 = vand.u32 %v1737, 4294901760
    %1839 = vmatmul.f32.gmra.mxu0 %v1838
    %v1840 = vpop.f32.mrf.mxu0
    %v1841 = vadd.f32 %v1784, %v1840
    %v1842 = vand.u32 %v1739, 4294901760
    %1843 = vmatmul.f32.gmra.mxu0 %v1842
    %v1844 = vpop.f32.mrf.mxu0
    %v1845 = vadd.f32 %v1792, %v1844
    %1846 = vdwg.mxu0
    %1847 = vmatpush.msra.mxu0 0.0
    %1848 = vmatpush.msra.mxu0 0.0
    %1849 = vmatpush.msra.mxu0 0.0
    %1850 = vmatpush.msra.mxu0 0.0
    %1851 = vmatpush.msra.mxu0 0.0
    %1852 = vmatpush.msra.mxu0 0.0
    %1853 = vmatpush.msra.mxu0 0.0
    %1854 = vmatpush.msra.mxu0 0.0
    %1855 = vmatpush.msra.mxu0 0.0
    %1856 = vmatpush.msra.mxu0 0.0
    %1857 = vmatpush.msra.mxu0 0.0
    %1858 = vmatpush.msra.mxu0 0.0
    %v1859 = vand.u32 %v1706, 4294901760
    %v1860 = vsub.f32 %v1706, %v1859
    %1861 = vmatpush.msra.mxu0 %v1860
    %v1862 = vand.u32 %v1703, 4294901760
    %v1863 = vsub.f32 %v1703, %v1862
    %1864 = vmatpush.msra.mxu0 %v1863
    %v1865 = vand.u32 %v1700, 4294901760
    %v1866 = vsub.f32 %v1700, %v1865
    %1867 = vmatpush.msra.mxu0 %v1866
    %v1868 = vand.u32 %v1697, 4294901760
    %v1869 = vsub.f32 %v1697, %v1868
    %1870 = vmatpush.msra.mxu0 %v1869
    %v1871 = vand.u32 %v1733, 4294901760
    %v1872 = vsub.f32 %v1733, %v1871
    %1873 = vmatmul.f32.gmra.mxu0 %v1872
    %v1874 = vpop.f32.mrf.mxu0
    %v1875 = vadd.f32 %v1833, %v1874
    %v1876 = vand.u32 %v1735, 4294901760
    %v1877 = vsub.f32 %v1735, %v1876
    %1878 = vmatmul.f32.gmra.mxu0 %v1877
    %v1879 = vpop.f32.mrf.mxu0
    %v1880 = vadd.f32 %v1837, %v1879
    %v1881 = vand.u32 %v1737, 4294901760
    %v1882 = vsub.f32 %v1737, %v1881
    %1883 = vmatmul.f32.gmra.mxu0 %v1882
    %v1884 = vpop.f32.mrf.mxu0
    %v1885 = vadd.f32 %v1841, %v1884
    %v1886 = vand.u32 %v1739, 4294901760
    %v1887 = vsub.f32 %v1739, %v1886
    %1888 = vmatmul.f32.gmra.mxu0 %v1887
    %v1889 = vpop.f32.mrf.mxu0
    %v1890 = vadd.f32 %v1845, %v1889
    %1891 = vdwg.mxu0
    %1892 = vmatpush.msra.mxu0 0.0
    %1893 = vmatpush.msra.mxu0 0.0
    %1894 = vmatpush.msra.mxu0 0.0
    %1895 = vmatpush.msra.mxu0 0.0
    %1896 = vmatpush.msra.mxu0 0.0
    %1897 = vmatpush.msra.mxu0 0.0
    %1898 = vmatpush.msra.mxu0 0.0
    %1899 = vmatpush.msra.mxu0 0.0
    %1900 = vmatpush.msra.mxu0 0.0
    %1901 = vmatpush.msra.mxu0 0.0
    %1902 = vmatpush.msra.mxu0 0.0
    %1903 = vmatpush.msra.mxu0 0.0
    %v1904 = vand.u32 %v1706, 4294901760
    %1905 = vmatpush.msra.mxu0 %v1904
    %v1906 = vand.u32 %v1703, 4294901760
    %1907 = vmatpush.msra.mxu0 %v1906
    %v1908 = vand.u32 %v1700, 4294901760
    %1909 = vmatpush.msra.mxu0 %v1908
    %v1910 = vand.u32 %v1697, 4294901760
    %1911 = vmatpush.msra.mxu0 %v1910
    %v1912 = vand.u32 %v1733, 4294901760
    %v1913 = vsub.f32 %v1733, %v1912
    %v1914 = vand.u32 %v1913, 4294901760
    %1915 = vmatmul.f32.gmra.mxu0 %v1914
    %v1916 = vpop.f32.mrf.mxu0
    %v1917 = vadd.f32 %v1875, %v1916
    %v1918 = vand.u32 %v1735, 4294901760
    %v1919 = vsub.f32 %v1735, %v1918
    %v1920 = vand.u32 %v1919, 4294901760
    %1921 = vmatmul.f32.gmra.mxu0 %v1920
    %v1922 = vpop.f32.mrf.mxu0
    %v1923 = vadd.f32 %v1880, %v1922
    %v1924 = vand.u32 %v1737, 4294901760
    %v1925 = vsub.f32 %v1737, %v1924
    %v1926 = vand.u32 %v1925, 4294901760
    %1927 = vmatmul.f32.gmra.mxu0 %v1926
    %v1928 = vpop.f32.mrf.mxu0
    %v1929 = vadd.f32 %v1885, %v1928
    %v1930 = vand.u32 %v1739, 4294901760
    %v1931 = vsub.f32 %v1739, %v1930
    %v1932 = vand.u32 %v1931, 4294901760
    %1933 = vmatmul.f32.gmra.mxu0 %v1932
    %v1934 = vpop.f32.mrf.mxu0
    %v1935 = vadd.f32 %v1890, %v1934
    %1936 = vdwg.mxu0
    %1937 = vmatpush.msra.mxu0 0.0
    %1938 = vmatpush.msra.mxu0 0.0
    %1939 = vmatpush.msra.mxu0 0.0
    %1940 = vmatpush.msra.mxu0 0.0
    %1941 = vmatpush.msra.mxu0 0.0
    %1942 = vmatpush.msra.mxu0 0.0
    %1943 = vmatpush.msra.mxu0 0.0
    %1944 = vmatpush.msra.mxu0 0.0
    %1945 = vmatpush.msra.mxu0 0.0
    %1946 = vmatpush.msra.mxu0 0.0
    %1947 = vmatpush.msra.mxu0 0.0
    %1948 = vmatpush.msra.mxu0 0.0
    %v1949 = vand.u32 %v1706, 4294901760
    %v1950 = vsub.f32 %v1706, %v1949
    %v1951 = vand.u32 %v1950, 4294901760
    %1952 = vmatpush.msra.mxu0 %v1951
    %v1953 = vand.u32 %v1703, 4294901760
    %v1954 = vsub.f32 %v1703, %v1953
    %v1955 = vand.u32 %v1954, 4294901760
    %1956 = vmatpush.msra.mxu0 %v1955
    %v1957 = vand.u32 %v1700, 4294901760
    %v1958 = vsub.f32 %v1700, %v1957
    %v1959 = vand.u32 %v1958, 4294901760
    %1960 = vmatpush.msra.mxu0 %v1959
    %v1961 = vand.u32 %v1697, 4294901760
    %v1962 = vsub.f32 %v1697, %v1961
    %v1963 = vand.u32 %v1962, 4294901760
    %1964 = vmatpush.msra.mxu0 %v1963
    %v1965 = vand.u32 %v1733, 4294901760
    %1966 = vmatmul.f32.gmra.mxu0 %v1965
    %v1967 = vpop.f32.mrf.mxu0
    %v1968 = vadd.f32 %v1917, %v1967
    %v1969 = vand.u32 %v1735, 4294901760
    %1970 = vmatmul.f32.gmra.mxu0 %v1969
    %v1971 = vpop.f32.mrf.mxu0
    %v1972 = vadd.f32 %v1923, %v1971
    %v1973 = vand.u32 %v1737, 4294901760
    %1974 = vmatmul.f32.gmra.mxu0 %v1973
    %v1975 = vpop.f32.mrf.mxu0
    %v1976 = vadd.f32 %v1929, %v1975
    %v1977 = vand.u32 %v1739, 4294901760
    %1978 = vmatmul.f32.gmra.mxu0 %v1977
    %v1979 = vpop.f32.mrf.mxu0
    %v1980 = vadd.f32 %v1935, %v1979
    %1981 = vdwg.mxu0
    %1982 = vmatpush.msra.mxu0 0.0
    %1983 = vmatpush.msra.mxu0 0.0
    %1984 = vmatpush.msra.mxu0 0.0
    %1985 = vmatpush.msra.mxu0 0.0
    %1986 = vmatpush.msra.mxu0 0.0
    %1987 = vmatpush.msra.mxu0 0.0
    %1988 = vmatpush.msra.mxu0 0.0
    %1989 = vmatpush.msra.mxu0 0.0
    %1990 = vmatpush.msra.mxu0 0.0
    %1991 = vmatpush.msra.mxu0 0.0
    %1992 = vmatpush.msra.mxu0 0.0
    %1993 = vmatpush.msra.mxu0 0.0
    %v1994 = vand.u32 %v1706, 4294901760
    %1995 = vmatpush.msra.mxu0 %v1994
    %v1996 = vand.u32 %v1703, 4294901760
    %1997 = vmatpush.msra.mxu0 %v1996
    %v1998 = vand.u32 %v1700, 4294901760
    %1999 = vmatpush.msra.mxu0 %v1998
    %v2000 = vand.u32 %v1697, 4294901760
    %2001 = vmatpush.msra.mxu0 %v2000
    %v2002 = vand.u32 %v1733, 4294901760
    %2003 = vmatmul.f32.gmra.mxu0 %v2002
    %v2004 = vpop.f32.mrf.mxu0
    %v2005 = vadd.f32 %v1968, %v2004
    %v2006 = vand.u32 %v1735, 4294901760
    %2007 = vmatmul.f32.gmra.mxu0 %v2006
    %v2008 = vpop.f32.mrf.mxu0
    %v2009 = vadd.f32 %v1972, %v2008
    %v2010 = vand.u32 %v1737, 4294901760
    %2011 = vmatmul.f32.gmra.mxu0 %v2010
    %v2012 = vpop.f32.mrf.mxu0
    %v2013 = vadd.f32 %v1976, %v2012
    %v2014 = vand.u32 %v1739, 4294901760
    %2015 = vmatmul.f32.gmra.mxu0 %v2014
    %v2016 = vpop.f32.mrf.mxu0
    %v2017 = vadd.f32 %v1980, %v2016
    %2018 = vdwg.mxu0
    %2019 = vmatpush.msra.mxu0 0.0
    %2020 = vmatpush.msra.mxu0 0.0
    %2021 = vmatpush.msra.mxu0 0.0
    %2022 = vmatpush.msra.mxu0 0.0
    %2023 = vmatpush.msra.mxu0 0.0
    %2024 = vmatpush.msra.mxu0 0.0
    %2025 = vmatpush.msra.mxu0 0.0
    %2026 = vmatpush.msra.mxu0 0.0
    %2027 = vmatpush.msra.mxu0 0.0
    %2028 = vmatpush.msra.mxu0 0.0
    %2029 = vmatpush.msra.mxu0 0.0
    %2030 = vmatpush.msra.mxu0 0.0
    %v2031 = vand.u32 %v1707, 4294901760
    %2032 = vmatpush.msra.mxu0 %v2031
    %v2033 = vand.u32 %v1704, 4294901760
    %2034 = vmatpush.msra.mxu0 %v2033
    %v2035 = vand.u32 %v1701, 4294901760
    %2036 = vmatpush.msra.mxu0 %v2035
    %v2037 = vand.u32 %v1698, 4294901760
    %2038 = vmatpush.msra.mxu0 %v2037
    %v2039 = vand.u32 %v1733, 4294901760
    %v2040 = vsub.f32 %v1733, %v2039
    %v2041 = vand.u32 %v2040, 4294901760
    %v2042 = vsub.f32 %v2040, %v2041
    %v2043 = vand.u32 %v2042, 4294901760
    %2044 = vmatmul.f32.gmra.mxu0 %v2043
    %v2045 = vpop.f32.mrf.mxu0
    %v2046 = vadd.f32 %v1716, %v2045
    %v2047 = vand.u32 %v1735, 4294901760
    %v2048 = vsub.f32 %v1735, %v2047
    %v2049 = vand.u32 %v2048, 4294901760
    %v2050 = vsub.f32 %v2048, %v2049
    %v2051 = vand.u32 %v2050, 4294901760
    %2052 = vmatmul.f32.gmra.mxu0 %v2051
    %v2053 = vpop.f32.mrf.mxu0
    %v2054 = vadd.f32 %v1721, %v2053
    %v2055 = vand.u32 %v1737, 4294901760
    %v2056 = vsub.f32 %v1737, %v2055
    %v2057 = vand.u32 %v2056, 4294901760
    %v2058 = vsub.f32 %v2056, %v2057
    %v2059 = vand.u32 %v2058, 4294901760
    %2060 = vmatmul.f32.gmra.mxu0 %v2059
    %v2061 = vpop.f32.mrf.mxu0
    %v2062 = vadd.f32 %v1726, %v2061
    %v2063 = vand.u32 %v1739, 4294901760
    %v2064 = vsub.f32 %v1739, %v2063
    %v2065 = vand.u32 %v2064, 4294901760
    %v2066 = vsub.f32 %v2064, %v2065
    %v2067 = vand.u32 %v2066, 4294901760
    %2068 = vmatmul.f32.gmra.mxu0 %v2067
    %v2069 = vpop.f32.mrf.mxu0
    %v2070 = vadd.f32 %v1731, %v2069
    %2071 = vdwg.mxu0
    %2072 = vmatpush.msra.mxu0 0.0
    %2073 = vmatpush.msra.mxu0 0.0
    %2074 = vmatpush.msra.mxu0 0.0
    %2075 = vmatpush.msra.mxu0 0.0
    %2076 = vmatpush.msra.mxu0 0.0
    %2077 = vmatpush.msra.mxu0 0.0
    %2078 = vmatpush.msra.mxu0 0.0
    %2079 = vmatpush.msra.mxu0 0.0
    %2080 = vmatpush.msra.mxu0 0.0
    %2081 = vmatpush.msra.mxu0 0.0
    %2082 = vmatpush.msra.mxu0 0.0
    %2083 = vmatpush.msra.mxu0 0.0
    %v2084 = vand.u32 %v1707, 4294901760
    %v2085 = vsub.f32 %v1707, %v2084
    %v2086 = vand.u32 %v2085, 4294901760
    %v2087 = vsub.f32 %v2085, %v2086
    %v2088 = vand.u32 %v2087, 4294901760
    %2089 = vmatpush.msra.mxu0 %v2088
    %v2090 = vand.u32 %v1704, 4294901760
    %v2091 = vsub.f32 %v1704, %v2090
    %v2092 = vand.u32 %v2091, 4294901760
    %v2093 = vsub.f32 %v2091, %v2092
    %v2094 = vand.u32 %v2093, 4294901760
    %2095 = vmatpush.msra.mxu0 %v2094
    %v2096 = vand.u32 %v1701, 4294901760
    %v2097 = vsub.f32 %v1701, %v2096
    %v2098 = vand.u32 %v2097, 4294901760
    %v2099 = vsub.f32 %v2097, %v2098
    %v2100 = vand.u32 %v2099, 4294901760
    %2101 = vmatpush.msra.mxu0 %v2100
    %v2102 = vand.u32 %v1698, 4294901760
    %v2103 = vsub.f32 %v1698, %v2102
    %v2104 = vand.u32 %v2103, 4294901760
    %v2105 = vsub.f32 %v2103, %v2104
    %v2106 = vand.u32 %v2105, 4294901760
    %2107 = vmatpush.msra.mxu0 %v2106
    %v2108 = vand.u32 %v1733, 4294901760
    %2109 = vmatmul.f32.gmra.mxu0 %v2108
    %v2110 = vpop.f32.mrf.mxu0
    %v2111 = vadd.f32 %v2046, %v2110
    %v2112 = vand.u32 %v1735, 4294901760
    %2113 = vmatmul.f32.gmra.mxu0 %v2112
    %v2114 = vpop.f32.mrf.mxu0
    %v2115 = vadd.f32 %v2054, %v2114
    %v2116 = vand.u32 %v1737, 4294901760
    %2117 = vmatmul.f32.gmra.mxu0 %v2116
    %v2118 = vpop.f32.mrf.mxu0
    %v2119 = vadd.f32 %v2062, %v2118
    %v2120 = vand.u32 %v1739, 4294901760
    %2121 = vmatmul.f32.gmra.mxu0 %v2120
    %v2122 = vpop.f32.mrf.mxu0
    %v2123 = vadd.f32 %v2070, %v2122
    %2124 = vdwg.mxu0
    %2125 = vmatpush.msra.mxu0 0.0
    %2126 = vmatpush.msra.mxu0 0.0
    %2127 = vmatpush.msra.mxu0 0.0
    %2128 = vmatpush.msra.mxu0 0.0
    %2129 = vmatpush.msra.mxu0 0.0
    %2130 = vmatpush.msra.mxu0 0.0
    %2131 = vmatpush.msra.mxu0 0.0
    %2132 = vmatpush.msra.mxu0 0.0
    %2133 = vmatpush.msra.mxu0 0.0
    %2134 = vmatpush.msra.mxu0 0.0
    %2135 = vmatpush.msra.mxu0 0.0
    %2136 = vmatpush.msra.mxu0 0.0
    %v2137 = vand.u32 %v1707, 4294901760
    %v2138 = vsub.f32 %v1707, %v2137
    %2139 = vmatpush.msra.mxu0 %v2138
    %v2140 = vand.u32 %v1704, 4294901760
    %v2141 = vsub.f32 %v1704, %v2140
    %2142 = vmatpush.msra.mxu0 %v2141
    %v2143 = vand.u32 %v1701, 4294901760
    %v2144 = vsub.f32 %v1701, %v2143
    %2145 = vmatpush.msra.mxu0 %v2144
    %v2146 = vand.u32 %v1698, 4294901760
    %v2147 = vsub.f32 %v1698, %v2146
    %2148 = vmatpush.msra.mxu0 %v2147
    %v2149 = vand.u32 %v1733, 4294901760
    %v2150 = vsub.f32 %v1733, %v2149
    %2151 = vmatmul.f32.gmra.mxu0 %v2150
    %v2152 = vpop.f32.mrf.mxu0
    %v2153 = vadd.f32 %v2111, %v2152
    %v2154 = vand.u32 %v1735, 4294901760
    %v2155 = vsub.f32 %v1735, %v2154
    %2156 = vmatmul.f32.gmra.mxu0 %v2155
    %v2157 = vpop.f32.mrf.mxu0
    %v2158 = vadd.f32 %v2115, %v2157
    %v2159 = vand.u32 %v1737, 4294901760
    %v2160 = vsub.f32 %v1737, %v2159
    %2161 = vmatmul.f32.gmra.mxu0 %v2160
    %v2162 = vpop.f32.mrf.mxu0
    %v2163 = vadd.f32 %v2119, %v2162
    %v2164 = vand.u32 %v1739, 4294901760
    %v2165 = vsub.f32 %v1739, %v2164
    %2166 = vmatmul.f32.gmra.mxu0 %v2165
    %v2167 = vpop.f32.mrf.mxu0
    %v2168 = vadd.f32 %v2123, %v2167
    %2169 = vdwg.mxu0
    %2170 = vmatpush.msra.mxu0 0.0
    %2171 = vmatpush.msra.mxu0 0.0
    %2172 = vmatpush.msra.mxu0 0.0
    %2173 = vmatpush.msra.mxu0 0.0
    %2174 = vmatpush.msra.mxu0 0.0
    %2175 = vmatpush.msra.mxu0 0.0
    %2176 = vmatpush.msra.mxu0 0.0
    %2177 = vmatpush.msra.mxu0 0.0
    %2178 = vmatpush.msra.mxu0 0.0
    %2179 = vmatpush.msra.mxu0 0.0
    %2180 = vmatpush.msra.mxu0 0.0
    %2181 = vmatpush.msra.mxu0 0.0
    %v2182 = vand.u32 %v1707, 4294901760
    %2183 = vmatpush.msra.mxu0 %v2182
    %v2184 = vand.u32 %v1704, 4294901760
    %2185 = vmatpush.msra.mxu0 %v2184
    %v2186 = vand.u32 %v1701, 4294901760
    %2187 = vmatpush.msra.mxu0 %v2186
    %v2188 = vand.u32 %v1698, 4294901760
    %2189 = vmatpush.msra.mxu0 %v2188
    %v2190 = vand.u32 %v1733, 4294901760
    %v2191 = vsub.f32 %v1733, %v2190
    %v2192 = vand.u32 %v2191, 4294901760
    %2193 = vmatmul.f32.gmra.mxu0 %v2192
    %v2194 = vpop.f32.mrf.mxu0
    %v2195 = vadd.f32 %v2153, %v2194
    %v2196 = vand.u32 %v1735, 4294901760
    %v2197 = vsub.f32 %v1735, %v2196
    %v2198 = vand.u32 %v2197, 4294901760
    %2199 = vmatmul.f32.gmra.mxu0 %v2198
    %v2200 = vpop.f32.mrf.mxu0
    %v2201 = vadd.f32 %v2158, %v2200
    %v2202 = vand.u32 %v1737, 4294901760
    %v2203 = vsub.f32 %v1737, %v2202
    %v2204 = vand.u32 %v2203, 4294901760
    %2205 = vmatmul.f32.gmra.mxu0 %v2204
    %v2206 = vpop.f32.mrf.mxu0
    %v2207 = vadd.f32 %v2163, %v2206
    %v2208 = vand.u32 %v1739, 4294901760
    %v2209 = vsub.f32 %v1739, %v2208
    %v2210 = vand.u32 %v2209, 4294901760
    %2211 = vmatmul.f32.gmra.mxu0 %v2210
    %v2212 = vpop.f32.mrf.mxu0
    %v2213 = vadd.f32 %v2168, %v2212
    %2214 = vdwg.mxu0
    %2215 = vmatpush.msra.mxu0 0.0
    %2216 = vmatpush.msra.mxu0 0.0
    %2217 = vmatpush.msra.mxu0 0.0
    %2218 = vmatpush.msra.mxu0 0.0
    %2219 = vmatpush.msra.mxu0 0.0
    %2220 = vmatpush.msra.mxu0 0.0
    %2221 = vmatpush.msra.mxu0 0.0
    %2222 = vmatpush.msra.mxu0 0.0
    %2223 = vmatpush.msra.mxu0 0.0
    %2224 = vmatpush.msra.mxu0 0.0
    %2225 = vmatpush.msra.mxu0 0.0
    %2226 = vmatpush.msra.mxu0 0.0
    %v2227 = vand.u32 %v1707, 4294901760
    %v2228 = vsub.f32 %v1707, %v2227
    %v2229 = vand.u32 %v2228, 4294901760
    %2230 = vmatpush.msra.mxu0 %v2229
    %v2231 = vand.u32 %v1704, 4294901760
    %v2232 = vsub.f32 %v1704, %v2231
    %v2233 = vand.u32 %v2232, 4294901760
    %2234 = vmatpush.msra.mxu0 %v2233
    %v2235 = vand.u32 %v1701, 4294901760
    %v2236 = vsub.f32 %v1701, %v2235
    %v2237 = vand.u32 %v2236, 4294901760
    %2238 = vmatpush.msra.mxu0 %v2237
    %v2239 = vand.u32 %v1698, 4294901760
    %v2240 = vsub.f32 %v1698, %v2239
    %v2241 = vand.u32 %v2240, 4294901760
    %2242 = vmatpush.msra.mxu0 %v2241
    %v2243 = vand.u32 %v1733, 4294901760
    %2244 = vmatmul.f32.gmra.mxu0 %v2243
    %v2245 = vpop.f32.mrf.mxu0
    %v2246 = vadd.f32 %v2195, %v2245
    %v2247 = vand.u32 %v1735, 4294901760
    %2248 = vmatmul.f32.gmra.mxu0 %v2247
    %v2249 = vpop.f32.mrf.mxu0
    %v2250 = vadd.f32 %v2201, %v2249
    %v2251 = vand.u32 %v1737, 4294901760
    %2252 = vmatmul.f32.gmra.mxu0 %v2251
    %v2253 = vpop.f32.mrf.mxu0
    %v2254 = vadd.f32 %v2207, %v2253
    %v2255 = vand.u32 %v1739, 4294901760
    %2256 = vmatmul.f32.gmra.mxu0 %v2255
    %v2257 = vpop.f32.mrf.mxu0
    %v2258 = vadd.f32 %v2213, %v2257
    %2259 = vdwg.mxu0
    %2260 = vmatpush.msra.mxu0 0.0
    %2261 = vmatpush.msra.mxu0 0.0
    %2262 = vmatpush.msra.mxu0 0.0
    %2263 = vmatpush.msra.mxu0 0.0
    %2264 = vmatpush.msra.mxu0 0.0
    %2265 = vmatpush.msra.mxu0 0.0
    %2266 = vmatpush.msra.mxu0 0.0
    %2267 = vmatpush.msra.mxu0 0.0
    %2268 = vmatpush.msra.mxu0 0.0
    %2269 = vmatpush.msra.mxu0 0.0
    %2270 = vmatpush.msra.mxu0 0.0
    %2271 = vmatpush.msra.mxu0 0.0
    %v2272 = vand.u32 %v1707, 4294901760
    %2273 = vmatpush.msra.mxu0 %v2272
    %v2274 = vand.u32 %v1704, 4294901760
    %2275 = vmatpush.msra.mxu0 %v2274
    %v2276 = vand.u32 %v1701, 4294901760
    %2277 = vmatpush.msra.mxu0 %v2276
    %v2278 = vand.u32 %v1698, 4294901760
    %2279 = vmatpush.msra.mxu0 %v2278
    %v2280 = vand.u32 %v1733, 4294901760
    %2281 = vmatmul.f32.gmra.mxu0 %v2280
    %v2282 = vpop.f32.mrf.mxu0
    %v2283 = vadd.f32 %v2246, %v2282
    %v2284 = vand.u32 %v1735, 4294901760
    %2285 = vmatmul.f32.gmra.mxu0 %v2284
    %v2286 = vpop.f32.mrf.mxu0
    %v2287 = vadd.f32 %v2250, %v2286
    %v2288 = vand.u32 %v1737, 4294901760
    %2289 = vmatmul.f32.gmra.mxu0 %v2288
    %v2290 = vpop.f32.mrf.mxu0
    %v2291 = vadd.f32 %v2254, %v2290
    %v2292 = vand.u32 %v1739, 4294901760
    %2293 = vmatmul.f32.gmra.mxu0 %v2292
    %v2294 = vpop.f32.mrf.mxu0
    %v2295 = vadd.f32 %v2258, %v2294
    %2296 = vdwg.mxu0
    %2297 = vmatpush.msra.mxu0 0.0
    %2298 = vmatpush.msra.mxu0 0.0
    %2299 = vmatpush.msra.mxu0 0.0
    %2300 = vmatpush.msra.mxu0 0.0
    %2301 = vmatpush.msra.mxu0 0.0
    %2302 = vmatpush.msra.mxu0 0.0
    %2303 = vmatpush.msra.mxu0 0.0
    %2304 = vmatpush.msra.mxu0 0.0
    %2305 = vmatpush.msra.mxu0 0.0
    %2306 = vmatpush.msra.mxu0 0.0
    %2307 = vmatpush.msra.mxu0 0.0
    %2308 = vmatpush.msra.mxu0 0.0
    %v2309 = vand.u32 %v1708, 4294901760
    %2310 = vmatpush.msra.mxu0 %v2309
    %v2311 = vand.u32 %v1705, 4294901760
    %2312 = vmatpush.msra.mxu0 %v2311
    %v2313 = vand.u32 %v1702, 4294901760
    %2314 = vmatpush.msra.mxu0 %v2313
    %v2315 = vand.u32 %v1699, 4294901760
    %2316 = vmatpush.msra.mxu0 %v2315
    %v2317 = vand.u32 %v1733, 4294901760
    %v2318 = vsub.f32 %v1733, %v2317
    %v2319 = vand.u32 %v2318, 4294901760
    %v2320 = vsub.f32 %v2318, %v2319
    %v2321 = vand.u32 %v2320, 4294901760
    %2322 = vmatmul.f32.gmra.mxu0 %v2321
    %v2323 = vpop.f32.mrf.mxu0
    %v2324 = vadd.f32 %v1716, %v2323
    %v2325 = vand.u32 %v1735, 4294901760
    %v2326 = vsub.f32 %v1735, %v2325
    %v2327 = vand.u32 %v2326, 4294901760
    %v2328 = vsub.f32 %v2326, %v2327
    %v2329 = vand.u32 %v2328, 4294901760
    %2330 = vmatmul.f32.gmra.mxu0 %v2329
    %v2331 = vpop.f32.mrf.mxu0
    %v2332 = vadd.f32 %v1721, %v2331
    %v2333 = vand.u32 %v1737, 4294901760
    %v2334 = vsub.f32 %v1737, %v2333
    %v2335 = vand.u32 %v2334, 4294901760
    %v2336 = vsub.f32 %v2334, %v2335
    %v2337 = vand.u32 %v2336, 4294901760
    %2338 = vmatmul.f32.gmra.mxu0 %v2337
    %v2339 = vpop.f32.mrf.mxu0
    %v2340 = vadd.f32 %v1726, %v2339
    %v2341 = vand.u32 %v1739, 4294901760
    %v2342 = vsub.f32 %v1739, %v2341
    %v2343 = vand.u32 %v2342, 4294901760
    %v2344 = vsub.f32 %v2342, %v2343
    %v2345 = vand.u32 %v2344, 4294901760
    %2346 = vmatmul.f32.gmra.mxu0 %v2345
    %v2347 = vpop.f32.mrf.mxu0
    %v2348 = vadd.f32 %v1731, %v2347
    %2349 = vdwg.mxu0
    %2350 = vmatpush.msra.mxu0 0.0
    %2351 = vmatpush.msra.mxu0 0.0
    %2352 = vmatpush.msra.mxu0 0.0
    %2353 = vmatpush.msra.mxu0 0.0
    %2354 = vmatpush.msra.mxu0 0.0
    %2355 = vmatpush.msra.mxu0 0.0
    %2356 = vmatpush.msra.mxu0 0.0
    %2357 = vmatpush.msra.mxu0 0.0
    %2358 = vmatpush.msra.mxu0 0.0
    %2359 = vmatpush.msra.mxu0 0.0
    %2360 = vmatpush.msra.mxu0 0.0
    %2361 = vmatpush.msra.mxu0 0.0
    %v2362 = vand.u32 %v1708, 4294901760
    %v2363 = vsub.f32 %v1708, %v2362
    %v2364 = vand.u32 %v2363, 4294901760
    %v2365 = vsub.f32 %v2363, %v2364
    %v2366 = vand.u32 %v2365, 4294901760
    %2367 = vmatpush.msra.mxu0 %v2366
    %v2368 = vand.u32 %v1705, 4294901760
    %v2369 = vsub.f32 %v1705, %v2368
    %v2370 = vand.u32 %v2369, 4294901760
    %v2371 = vsub.f32 %v2369, %v2370
    %v2372 = vand.u32 %v2371, 4294901760
    %2373 = vmatpush.msra.mxu0 %v2372
    %v2374 = vand.u32 %v1702, 4294901760
    %v2375 = vsub.f32 %v1702, %v2374
    %v2376 = vand.u32 %v2375, 4294901760
    %v2377 = vsub.f32 %v2375, %v2376
    %v2378 = vand.u32 %v2377, 4294901760
    %2379 = vmatpush.msra.mxu0 %v2378
    %v2380 = vand.u32 %v1699, 4294901760
    %v2381 = vsub.f32 %v1699, %v2380
    %v2382 = vand.u32 %v2381, 4294901760
    %v2383 = vsub.f32 %v2381, %v2382
    %v2384 = vand.u32 %v2383, 4294901760
    %2385 = vmatpush.msra.mxu0 %v2384
    %v2386 = vand.u32 %v1733, 4294901760
    %2387 = vmatmul.f32.gmra.mxu0 %v2386
    %v2388 = vpop.f32.mrf.mxu0
    %v2389 = vadd.f32 %v2324, %v2388
    %v2390 = vand.u32 %v1735, 4294901760
    %2391 = vmatmul.f32.gmra.mxu0 %v2390
    %v2392 = vpop.f32.mrf.mxu0
    %v2393 = vadd.f32 %v2332, %v2392
    %v2394 = vand.u32 %v1737, 4294901760
    %2395 = vmatmul.f32.gmra.mxu0 %v2394
    %v2396 = vpop.f32.mrf.mxu0
    %v2397 = vadd.f32 %v2340, %v2396
    %v2398 = vand.u32 %v1739, 4294901760
    %2399 = vmatmul.f32.gmra.mxu0 %v2398
    %v2400 = vpop.f32.mrf.mxu0
    %v2401 = vadd.f32 %v2348, %v2400
    %2402 = vdwg.mxu0
    %2403 = vmatpush.msra.mxu0 0.0
    %2404 = vmatpush.msra.mxu0 0.0
    %2405 = vmatpush.msra.mxu0 0.0
    %2406 = vmatpush.msra.mxu0 0.0
    %2407 = vmatpush.msra.mxu0 0.0
    %2408 = vmatpush.msra.mxu0 0.0
    %2409 = vmatpush.msra.mxu0 0.0
    %2410 = vmatpush.msra.mxu0 0.0
    %2411 = vmatpush.msra.mxu0 0.0
    %2412 = vmatpush.msra.mxu0 0.0
    %2413 = vmatpush.msra.mxu0 0.0
    %2414 = vmatpush.msra.mxu0 0.0
    %v2415 = vand.u32 %v1708, 4294901760
    %v2416 = vsub.f32 %v1708, %v2415
    %2417 = vmatpush.msra.mxu0 %v2416
    %v2418 = vand.u32 %v1705, 4294901760
    %v2419 = vsub.f32 %v1705, %v2418
    %2420 = vmatpush.msra.mxu0 %v2419
    %v2421 = vand.u32 %v1702, 4294901760
    %v2422 = vsub.f32 %v1702, %v2421
    %2423 = vmatpush.msra.mxu0 %v2422
    %v2424 = vand.u32 %v1699, 4294901760
    %v2425 = vsub.f32 %v1699, %v2424
    %2426 = vmatpush.msra.mxu0 %v2425
    %v2427 = vand.u32 %v1733, 4294901760
    %v2428 = vsub.f32 %v1733, %v2427
    %2429 = vmatmul.f32.gmra.mxu0 %v2428
    %v2430 = vpop.f32.mrf.mxu0
    %v2431 = vadd.f32 %v2389, %v2430
    %v2432 = vand.u32 %v1735, 4294901760
    %v2433 = vsub.f32 %v1735, %v2432
    %2434 = vmatmul.f32.gmra.mxu0 %v2433
    %v2435 = vpop.f32.mrf.mxu0
    %v2436 = vadd.f32 %v2393, %v2435
    %v2437 = vand.u32 %v1737, 4294901760
    %v2438 = vsub.f32 %v1737, %v2437
    %2439 = vmatmul.f32.gmra.mxu0 %v2438
    %v2440 = vpop.f32.mrf.mxu0
    %v2441 = vadd.f32 %v2397, %v2440
    %v2442 = vand.u32 %v1739, 4294901760
    %v2443 = vsub.f32 %v1739, %v2442
    %2444 = vmatmul.f32.gmra.mxu0 %v2443
    %v2445 = vpop.f32.mrf.mxu0
    %v2446 = vadd.f32 %v2401, %v2445
    %2447 = vdwg.mxu0
    %2448 = vmatpush.msra.mxu0 0.0
    %2449 = vmatpush.msra.mxu0 0.0
    %2450 = vmatpush.msra.mxu0 0.0
    %2451 = vmatpush.msra.mxu0 0.0
    %2452 = vmatpush.msra.mxu0 0.0
    %2453 = vmatpush.msra.mxu0 0.0
    %2454 = vmatpush.msra.mxu0 0.0
    %2455 = vmatpush.msra.mxu0 0.0
    %2456 = vmatpush.msra.mxu0 0.0
    %2457 = vmatpush.msra.mxu0 0.0
    %2458 = vmatpush.msra.mxu0 0.0
    %2459 = vmatpush.msra.mxu0 0.0
    %v2460 = vand.u32 %v1708, 4294901760
    %2461 = vmatpush.msra.mxu0 %v2460
    %v2462 = vand.u32 %v1705, 4294901760
    %2463 = vmatpush.msra.mxu0 %v2462
    %v2464 = vand.u32 %v1702, 4294901760
    %2465 = vmatpush.msra.mxu0 %v2464
    %v2466 = vand.u32 %v1699, 4294901760
    %2467 = vmatpush.msra.mxu0 %v2466
    %v2468 = vand.u32 %v1733, 4294901760
    %v2469 = vsub.f32 %v1733, %v2468
    %v2470 = vand.u32 %v2469, 4294901760
    %2471 = vmatmul.f32.gmra.mxu0 %v2470
    %v2472 = vpop.f32.mrf.mxu0
    %v2473 = vadd.f32 %v2431, %v2472
    %v2474 = vand.u32 %v1735, 4294901760
    %v2475 = vsub.f32 %v1735, %v2474
    %v2476 = vand.u32 %v2475, 4294901760
    %2477 = vmatmul.f32.gmra.mxu0 %v2476
    %v2478 = vpop.f32.mrf.mxu0
    %v2479 = vadd.f32 %v2436, %v2478
    %v2480 = vand.u32 %v1737, 4294901760
    %v2481 = vsub.f32 %v1737, %v2480
    %v2482 = vand.u32 %v2481, 4294901760
    %2483 = vmatmul.f32.gmra.mxu0 %v2482
    %v2484 = vpop.f32.mrf.mxu0
    %v2485 = vadd.f32 %v2441, %v2484
    %v2486 = vand.u32 %v1739, 4294901760
    %v2487 = vsub.f32 %v1739, %v2486
    %v2488 = vand.u32 %v2487, 4294901760
    %2489 = vmatmul.f32.gmra.mxu0 %v2488
    %v2490 = vpop.f32.mrf.mxu0
    %v2491 = vadd.f32 %v2446, %v2490
    %2492 = vdwg.mxu0
    %2493 = vmatpush.msra.mxu0 0.0
    %2494 = vmatpush.msra.mxu0 0.0
    %2495 = vmatpush.msra.mxu0 0.0
    %2496 = vmatpush.msra.mxu0 0.0
    %2497 = vmatpush.msra.mxu0 0.0
    %2498 = vmatpush.msra.mxu0 0.0
    %2499 = vmatpush.msra.mxu0 0.0
    %2500 = vmatpush.msra.mxu0 0.0
    %2501 = vmatpush.msra.mxu0 0.0
    %2502 = vmatpush.msra.mxu0 0.0
    %2503 = vmatpush.msra.mxu0 0.0
    %2504 = vmatpush.msra.mxu0 0.0
    %v2505 = vand.u32 %v1708, 4294901760
    %v2506 = vsub.f32 %v1708, %v2505
    %v2507 = vand.u32 %v2506, 4294901760
    %2508 = vmatpush.msra.mxu0 %v2507
    %v2509 = vand.u32 %v1705, 4294901760
    %v2510 = vsub.f32 %v1705, %v2509
    %v2511 = vand.u32 %v2510, 4294901760
    %2512 = vmatpush.msra.mxu0 %v2511
    %v2513 = vand.u32 %v1702, 4294901760
    %v2514 = vsub.f32 %v1702, %v2513
    %v2515 = vand.u32 %v2514, 4294901760
    %2516 = vmatpush.msra.mxu0 %v2515
    %v2517 = vand.u32 %v1699, 4294901760
    %v2518 = vsub.f32 %v1699, %v2517
    %v2519 = vand.u32 %v2518, 4294901760
    %2520 = vmatpush.msra.mxu0 %v2519
    %v2521 = vand.u32 %v1733, 4294901760
    %2522 = vmatmul.f32.gmra.mxu0 %v2521
    %v2523 = vpop.f32.mrf.mxu0
    %v2524 = vadd.f32 %v2473, %v2523
    %v2525 = vand.u32 %v1735, 4294901760
    %2526 = vmatmul.f32.gmra.mxu0 %v2525
    %v2527 = vpop.f32.mrf.mxu0
    %v2528 = vadd.f32 %v2479, %v2527
    %v2529 = vand.u32 %v1737, 4294901760
    %2530 = vmatmul.f32.gmra.mxu0 %v2529
    %v2531 = vpop.f32.mrf.mxu0
    %v2532 = vadd.f32 %v2485, %v2531
    %v2533 = vand.u32 %v1739, 4294901760
    %2534 = vmatmul.f32.gmra.mxu0 %v2533
    %v2535 = vpop.f32.mrf.mxu0
    %v2536 = vadd.f32 %v2491, %v2535
    %2537 = vdwg.mxu0
    %2538 = vmatpush.msra.mxu0 0.0
    %2539 = vmatpush.msra.mxu0 0.0
    %2540 = vmatpush.msra.mxu0 0.0
    %2541 = vmatpush.msra.mxu0 0.0
    %2542 = vmatpush.msra.mxu0 0.0
    %2543 = vmatpush.msra.mxu0 0.0
    %2544 = vmatpush.msra.mxu0 0.0
    %2545 = vmatpush.msra.mxu0 0.0
    %2546 = vmatpush.msra.mxu0 0.0
    %2547 = vmatpush.msra.mxu0 0.0
    %2548 = vmatpush.msra.mxu0 0.0
    %2549 = vmatpush.msra.mxu0 0.0
    %v2550 = vand.u32 %v1708, 4294901760
    %2551 = vmatpush.msra.mxu0 %v2550
    %v2552 = vand.u32 %v1705, 4294901760
    %2553 = vmatpush.msra.mxu0 %v2552
    %v2554 = vand.u32 %v1702, 4294901760
    %2555 = vmatpush.msra.mxu0 %v2554
    %v2556 = vand.u32 %v1699, 4294901760
    %2557 = vmatpush.msra.mxu0 %v2556
    %v2558 = vand.u32 %v1733, 4294901760
    %2559 = vmatmul.f32.gmra.mxu0 %v2558
    %v2560 = vpop.f32.mrf.mxu0
    %v2561 = vadd.f32 %v2524, %v2560
    %v2562 = vand.u32 %v1735, 4294901760
    %2563 = vmatmul.f32.gmra.mxu0 %v2562
    %v2564 = vpop.f32.mrf.mxu0
    %v2565 = vadd.f32 %v2528, %v2564
    %v2566 = vand.u32 %v1737, 4294901760
    %2567 = vmatmul.f32.gmra.mxu0 %v2566
    %v2568 = vpop.f32.mrf.mxu0
    %v2569 = vadd.f32 %v2532, %v2568
    %v2570 = vand.u32 %v1739, 4294901760
    %2571 = vmatmul.f32.gmra.mxu0 %v2570
    %v2572 = vpop.f32.mrf.mxu0
    %v2573 = vadd.f32 %v2536, %v2572
    %2574 = vdwg.mxu0
    %v2575 = vtanh.pop %v2005
    %v2576 = vtanh.pop %v2283
    %v2577 = vtanh.pop %v2561
    %v2578 = vtanh.pop %v2009
    %v2579 = vtanh.pop %v2287
    %v2580 = vtanh.pop %v2565
    %v2581 = vtanh.pop %v2013
    %v2582 = vtanh.pop %v2291
    %v2583 = vtanh.pop %v2569
    %v2584 = vtanh.pop %v2017
    %v2585 = vtanh.pop %v2295
    %v2586 = vtanh.pop %v2573
    %v2587 = vld [vmem:[%s4] sm:$0x1]
    %2589 = vset.pattern.permute.xlu0 32
    %2590 = vperm.xlu0 %2589, %v2587
    %v2591 = vpop.permute.xlu0 %2590
    %v2593 = vperm.slane %v2591, 0
    %v2594 = vsel %vm854, %v2587, 0
    %2596 = vmatpush.msra.mxu0 0.0
    %2597 = vmatpush.msra.mxu0 0.0
    %2598 = vmatpush.msra.mxu0 0.0
    %2599 = vmatpush.msra.mxu0 0.0
    %2600 = vmatpush.msra.mxu0 0.0
    %2601 = vmatpush.msra.mxu0 0.0
    %2602 = vmatpush.msra.mxu0 0.0
    %2603 = vmatpush.msra.mxu0 0.0
    %2604 = vmatpush.msra.mxu0 0.0
    %2605 = vmatpush.msra.mxu0 0.0
    %2606 = vmatpush.msra.mxu0 0.0
    %2607 = vmatpush.msra.mxu0 0.0
    %v2608 = vand.u32 %v2584, 4294901760
    %2609 = vmatpush.msra.mxu0 %v2608
    %v2610 = vand.u32 %v2581, 4294901760
    %2611 = vmatpush.msra.mxu0 %v2610
    %v2612 = vand.u32 %v2578, 4294901760
    %2613 = vmatpush.msra.mxu0 %v2612
    %v2614 = vand.u32 %v2575, 4294901760
    %2615 = vmatpush.msra.mxu0 %v2614
    %v2616 = vand.u32 %v2594, 4294901760
    %v2617 = vsub.f32 %v2594, %v2616
    %v2618 = vand.u32 %v2617, 4294901760
    %v2619 = vsub.f32 %v2617, %v2618
    %v2620 = vand.u32 %v2619, 4294901760
    %2621 = vmatmul.f32.gmra.mxu0 %v2620
    %v2622 = vpop.f32.mrf.mxu0
    %v2623 = vadd.f32 %v2593, %v2622
    %2624 = vdwg.mxu0
    %2625 = vmatpush.msra.mxu0 0.0
    %2626 = vmatpush.msra.mxu0 0.0
    %2627 = vmatpush.msra.mxu0 0.0
    %2628 = vmatpush.msra.mxu0 0.0
    %2629 = vmatpush.msra.mxu0 0.0
    %2630 = vmatpush.msra.mxu0 0.0
    %2631 = vmatpush.msra.mxu0 0.0
    %2632 = vmatpush.msra.mxu0 0.0
    %2633 = vmatpush.msra.mxu0 0.0
    %2634 = vmatpush.msra.mxu0 0.0
    %2635 = vmatpush.msra.mxu0 0.0
    %2636 = vmatpush.msra.mxu0 0.0
    %v2637 = vand.u32 %v2584, 4294901760
    %v2638 = vsub.f32 %v2584, %v2637
    %v2639 = vand.u32 %v2638, 4294901760
    %v2640 = vsub.f32 %v2638, %v2639
    %v2641 = vand.u32 %v2640, 4294901760
    %2642 = vmatpush.msra.mxu0 %v2641
    %v2643 = vand.u32 %v2581, 4294901760
    %v2644 = vsub.f32 %v2581, %v2643
    %v2645 = vand.u32 %v2644, 4294901760
    %v2646 = vsub.f32 %v2644, %v2645
    %v2647 = vand.u32 %v2646, 4294901760
    %2648 = vmatpush.msra.mxu0 %v2647
    %v2649 = vand.u32 %v2578, 4294901760
    %v2650 = vsub.f32 %v2578, %v2649
    %v2651 = vand.u32 %v2650, 4294901760
    %v2652 = vsub.f32 %v2650, %v2651
    %v2653 = vand.u32 %v2652, 4294901760
    %2654 = vmatpush.msra.mxu0 %v2653
    %v2655 = vand.u32 %v2575, 4294901760
    %v2656 = vsub.f32 %v2575, %v2655
    %v2657 = vand.u32 %v2656, 4294901760
    %v2658 = vsub.f32 %v2656, %v2657
    %v2659 = vand.u32 %v2658, 4294901760
    %2660 = vmatpush.msra.mxu0 %v2659
    %v2661 = vand.u32 %v2594, 4294901760
    %2662 = vmatmul.f32.gmra.mxu0 %v2661
    %v2663 = vpop.f32.mrf.mxu0
    %v2664 = vadd.f32 %v2623, %v2663
    %2665 = vdwg.mxu0
    %2666 = vmatpush.msra.mxu0 0.0
    %2667 = vmatpush.msra.mxu0 0.0
    %2668 = vmatpush.msra.mxu0 0.0
    %2669 = vmatpush.msra.mxu0 0.0
    %2670 = vmatpush.msra.mxu0 0.0
    %2671 = vmatpush.msra.mxu0 0.0
    %2672 = vmatpush.msra.mxu0 0.0
    %2673 = vmatpush.msra.mxu0 0.0
    %2674 = vmatpush.msra.mxu0 0.0
    %2675 = vmatpush.msra.mxu0 0.0
    %2676 = vmatpush.msra.mxu0 0.0
    %2677 = vmatpush.msra.mxu0 0.0
    %v2678 = vand.u32 %v2584, 4294901760
    %v2679 = vsub.f32 %v2584, %v2678
    %2680 = vmatpush.msra.mxu0 %v2679
    %v2681 = vand.u32 %v2581, 4294901760
    %v2682 = vsub.f32 %v2581, %v2681
    %2683 = vmatpush.msra.mxu0 %v2682
    %v2684 = vand.u32 %v2578, 4294901760
    %v2685 = vsub.f32 %v2578, %v2684
    %2686 = vmatpush.msra.mxu0 %v2685
    %v2687 = vand.u32 %v2575, 4294901760
    %v2688 = vsub.f32 %v2575, %v2687
    %2689 = vmatpush.msra.mxu0 %v2688
    %v2690 = vand.u32 %v2594, 4294901760
    %v2691 = vsub.f32 %v2594, %v2690
    %2692 = vmatmul.f32.gmra.mxu0 %v2691
    %v2693 = vpop.f32.mrf.mxu0
    %v2694 = vadd.f32 %v2664, %v2693
    %2695 = vdwg.mxu0
    %2696 = vmatpush.msra.mxu0 0.0
    %2697 = vmatpush.msra.mxu0 0.0
    %2698 = vmatpush.msra.mxu0 0.0
    %2699 = vmatpush.msra.mxu0 0.0
    %2700 = vmatpush.msra.mxu0 0.0
    %2701 = vmatpush.msra.mxu0 0.0
    %2702 = vmatpush.msra.mxu0 0.0
    %2703 = vmatpush.msra.mxu0 0.0
    %2704 = vmatpush.msra.mxu0 0.0
    %2705 = vmatpush.msra.mxu0 0.0
    %2706 = vmatpush.msra.mxu0 0.0
    %2707 = vmatpush.msra.mxu0 0.0
    %v2708 = vand.u32 %v2584, 4294901760
    %2709 = vmatpush.msra.mxu0 %v2708
    %v2710 = vand.u32 %v2581, 4294901760
    %2711 = vmatpush.msra.mxu0 %v2710
    %v2712 = vand.u32 %v2578, 4294901760
    %2713 = vmatpush.msra.mxu0 %v2712
    %v2714 = vand.u32 %v2575, 4294901760
    %2715 = vmatpush.msra.mxu0 %v2714
    %v2716 = vand.u32 %v2594, 4294901760
    %v2717 = vsub.f32 %v2594, %v2716
    %v2718 = vand.u32 %v2717, 4294901760
    %2719 = vmatmul.f32.gmra.mxu0 %v2718
    %v2720 = vpop.f32.mrf.mxu0
    %v2721 = vadd.f32 %v2694, %v2720
    %2722 = vdwg.mxu0
    %2723 = vmatpush.msra.mxu0 0.0
    %2724 = vmatpush.msra.mxu0 0.0
    %2725 = vmatpush.msra.mxu0 0.0
    %2726 = vmatpush.msra.mxu0 0.0
    %2727 = vmatpush.msra.mxu0 0.0
    %2728 = vmatpush.msra.mxu0 0.0
    %2729 = vmatpush.msra.mxu0 0.0
    %2730 = vmatpush.msra.mxu0 0.0
    %2731 = vmatpush.msra.mxu0 0.0
    %2732 = vmatpush.msra.mxu0 0.0
    %2733 = vmatpush.msra.mxu0 0.0
    %2734 = vmatpush.msra.mxu0 0.0
    %v2735 = vand.u32 %v2584, 4294901760
    %v2736 = vsub.f32 %v2584, %v2735
    %v2737 = vand.u32 %v2736, 4294901760
    %2738 = vmatpush.msra.mxu0 %v2737
    %v2739 = vand.u32 %v2581, 4294901760
    %v2740 = vsub.f32 %v2581, %v2739
    %v2741 = vand.u32 %v2740, 4294901760
    %2742 = vmatpush.msra.mxu0 %v2741
    %v2743 = vand.u32 %v2578, 4294901760
    %v2744 = vsub.f32 %v2578, %v2743
    %v2745 = vand.u32 %v2744, 4294901760
    %2746 = vmatpush.msra.mxu0 %v2745
    %v2747 = vand.u32 %v2575, 4294901760
    %v2748 = vsub.f32 %v2575, %v2747
    %v2749 = vand.u32 %v2748, 4294901760
    %2750 = vmatpush.msra.mxu0 %v2749
    %v2751 = vand.u32 %v2594, 4294901760
    %2752 = vmatmul.f32.gmra.mxu0 %v2751
    %v2753 = vpop.f32.mrf.mxu0
    %v2754 = vadd.f32 %v2721, %v2753
    %2755 = vdwg.mxu0
    %2756 = vmatpush.msra.mxu0 0.0
    %2757 = vmatpush.msra.mxu0 0.0
    %2758 = vmatpush.msra.mxu0 0.0
    %2759 = vmatpush.msra.mxu0 0.0
    %2760 = vmatpush.msra.mxu0 0.0
    %2761 = vmatpush.msra.mxu0 0.0
    %2762 = vmatpush.msra.mxu0 0.0
    %2763 = vmatpush.msra.mxu0 0.0
    %2764 = vmatpush.msra.mxu0 0.0
    %2765 = vmatpush.msra.mxu0 0.0
    %2766 = vmatpush.msra.mxu0 0.0
    %2767 = vmatpush.msra.mxu0 0.0
    %v2768 = vand.u32 %v2584, 4294901760
    %2769 = vmatpush.msra.mxu0 %v2768
    %v2770 = vand.u32 %v2581, 4294901760
    %2771 = vmatpush.msra.mxu0 %v2770
    %v2772 = vand.u32 %v2578, 4294901760
    %2773 = vmatpush.msra.mxu0 %v2772
    %v2774 = vand.u32 %v2575, 4294901760
    %2775 = vmatpush.msra.mxu0 %v2774
    %v2776 = vand.u32 %v2594, 4294901760
    %2777 = vmatmul.f32.gmra.mxu0 %v2776
    %v2778 = vpop.f32.mrf.mxu0
    %v2779 = vadd.f32 %v2754, %v2778
    %2780 = vdwg.mxu0
    %2781 = vmatpush.msra.mxu0 0.0
    %2782 = vmatpush.msra.mxu0 0.0
    %2783 = vmatpush.msra.mxu0 0.0
    %2784 = vmatpush.msra.mxu0 0.0
    %2785 = vmatpush.msra.mxu0 0.0
    %2786 = vmatpush.msra.mxu0 0.0
    %2787 = vmatpush.msra.mxu0 0.0
    %2788 = vmatpush.msra.mxu0 0.0
    %2789 = vmatpush.msra.mxu0 0.0
    %2790 = vmatpush.msra.mxu0 0.0
    %2791 = vmatpush.msra.mxu0 0.0
    %2792 = vmatpush.msra.mxu0 0.0
    %v2793 = vand.u32 %v2585, 4294901760
    %2794 = vmatpush.msra.mxu0 %v2793
    %v2795 = vand.u32 %v2582, 4294901760
    %2796 = vmatpush.msra.mxu0 %v2795
    %v2797 = vand.u32 %v2579, 4294901760
    %2798 = vmatpush.msra.mxu0 %v2797
    %v2799 = vand.u32 %v2576, 4294901760
    %2800 = vmatpush.msra.mxu0 %v2799
    %v2801 = vand.u32 %v2594, 4294901760
    %v2802 = vsub.f32 %v2594, %v2801
    %v2803 = vand.u32 %v2802, 4294901760
    %v2804 = vsub.f32 %v2802, %v2803
    %v2805 = vand.u32 %v2804, 4294901760
    %2806 = vmatmul.f32.gmra.mxu0 %v2805
    %v2807 = vpop.f32.mrf.mxu0
    %v2808 = vadd.f32 %v2593, %v2807
    %2809 = vdwg.mxu0
    %2810 = vmatpush.msra.mxu0 0.0
    %2811 = vmatpush.msra.mxu0 0.0
    %2812 = vmatpush.msra.mxu0 0.0
    %2813 = vmatpush.msra.mxu0 0.0
    %2814 = vmatpush.msra.mxu0 0.0
    %2815 = vmatpush.msra.mxu0 0.0
    %2816 = vmatpush.msra.mxu0 0.0
    %2817 = vmatpush.msra.mxu0 0.0
    %2818 = vmatpush.msra.mxu0 0.0
    %2819 = vmatpush.msra.mxu0 0.0
    %2820 = vmatpush.msra.mxu0 0.0
    %2821 = vmatpush.msra.mxu0 0.0
    %v2822 = vand.u32 %v2585, 4294901760
    %v2823 = vsub.f32 %v2585, %v2822
    %v2824 = vand.u32 %v2823, 4294901760
    %v2825 = vsub.f32 %v2823, %v2824
    %v2826 = vand.u32 %v2825, 4294901760
    %2827 = vmatpush.msra.mxu0 %v2826
    %v2828 = vand.u32 %v2582, 4294901760
    %v2829 = vsub.f32 %v2582, %v2828
    %v2830 = vand.u32 %v2829, 4294901760
    %v2831 = vsub.f32 %v2829, %v2830
    %v2832 = vand.u32 %v2831, 4294901760
    %2833 = vmatpush.msra.mxu0 %v2832
    %v2834 = vand.u32 %v2579, 4294901760
    %v2835 = vsub.f32 %v2579, %v2834
    %v2836 = vand.u32 %v2835, 4294901760
    %v2837 = vsub.f32 %v2835, %v2836
    %v2838 = vand.u32 %v2837, 4294901760
    %2839 = vmatpush.msra.mxu0 %v2838
    %v2840 = vand.u32 %v2576, 4294901760
    %v2841 = vsub.f32 %v2576, %v2840
    %v2842 = vand.u32 %v2841, 4294901760
    %v2843 = vsub.f32 %v2841, %v2842
    %v2844 = vand.u32 %v2843, 4294901760
    %2845 = vmatpush.msra.mxu0 %v2844
    %v2846 = vand.u32 %v2594, 4294901760
    %2847 = vmatmul.f32.gmra.mxu0 %v2846
    %v2848 = vpop.f32.mrf.mxu0
    %v2849 = vadd.f32 %v2808, %v2848
    %2850 = vdwg.mxu0
    %2851 = vmatpush.msra.mxu0 0.0
    %2852 = vmatpush.msra.mxu0 0.0
    %2853 = vmatpush.msra.mxu0 0.0
    %2854 = vmatpush.msra.mxu0 0.0
    %2855 = vmatpush.msra.mxu0 0.0
    %2856 = vmatpush.msra.mxu0 0.0
    %2857 = vmatpush.msra.mxu0 0.0
    %2858 = vmatpush.msra.mxu0 0.0
    %2859 = vmatpush.msra.mxu0 0.0
    %2860 = vmatpush.msra.mxu0 0.0
    %2861 = vmatpush.msra.mxu0 0.0
    %2862 = vmatpush.msra.mxu0 0.0
    %v2863 = vand.u32 %v2585, 4294901760
    %v2864 = vsub.f32 %v2585, %v2863
    %2865 = vmatpush.msra.mxu0 %v2864
    %v2866 = vand.u32 %v2582, 4294901760
    %v2867 = vsub.f32 %v2582, %v2866
    %2868 = vmatpush.msra.mxu0 %v2867
    %v2869 = vand.u32 %v2579, 4294901760
    %v2870 = vsub.f32 %v2579, %v2869
    %2871 = vmatpush.msra.mxu0 %v2870
    %v2872 = vand.u32 %v2576, 4294901760
    %v2873 = vsub.f32 %v2576, %v2872
    %2874 = vmatpush.msra.mxu0 %v2873
    %v2875 = vand.u32 %v2594, 4294901760
    %v2876 = vsub.f32 %v2594, %v2875
    %2877 = vmatmul.f32.gmra.mxu0 %v2876
    %v2878 = vpop.f32.mrf.mxu0
    %v2879 = vadd.f32 %v2849, %v2878
    %2880 = vdwg.mxu0
    %2881 = vmatpush.msra.mxu0 0.0
    %2882 = vmatpush.msra.mxu0 0.0
    %2883 = vmatpush.msra.mxu0 0.0
    %2884 = vmatpush.msra.mxu0 0.0
    %2885 = vmatpush.msra.mxu0 0.0
    %2886 = vmatpush.msra.mxu0 0.0
    %2887 = vmatpush.msra.mxu0 0.0
    %2888 = vmatpush.msra.mxu0 0.0
    %2889 = vmatpush.msra.mxu0 0.0
    %2890 = vmatpush.msra.mxu0 0.0
    %2891 = vmatpush.msra.mxu0 0.0
    %2892 = vmatpush.msra.mxu0 0.0
    %v2893 = vand.u32 %v2585, 4294901760
    %2894 = vmatpush.msra.mxu0 %v2893
    %v2895 = vand.u32 %v2582, 4294901760
    %2896 = vmatpush.msra.mxu0 %v2895
    %v2897 = vand.u32 %v2579, 4294901760
    %2898 = vmatpush.msra.mxu0 %v2897
    %v2899 = vand.u32 %v2576, 4294901760
    %2900 = vmatpush.msra.mxu0 %v2899
    %v2901 = vand.u32 %v2594, 4294901760
    %v2902 = vsub.f32 %v2594, %v2901
    %v2903 = vand.u32 %v2902, 4294901760
    %2904 = vmatmul.f32.gmra.mxu0 %v2903
    %v2905 = vpop.f32.mrf.mxu0
    %v2906 = vadd.f32 %v2879, %v2905
    %2907 = vdwg.mxu0
    %2908 = vmatpush.msra.mxu0 0.0
    %2909 = vmatpush.msra.mxu0 0.0
    %2910 = vmatpush.msra.mxu0 0.0
    %2911 = vmatpush.msra.mxu0 0.0
    %2912 = vmatpush.msra.mxu0 0.0
    %2913 = vmatpush.msra.mxu0 0.0
    %2914 = vmatpush.msra.mxu0 0.0
    %2915 = vmatpush.msra.mxu0 0.0
    %2916 = vmatpush.msra.mxu0 0.0
    %2917 = vmatpush.msra.mxu0 0.0
    %2918 = vmatpush.msra.mxu0 0.0
    %2919 = vmatpush.msra.mxu0 0.0
    %v2920 = vand.u32 %v2585, 4294901760
    %v2921 = vsub.f32 %v2585, %v2920
    %v2922 = vand.u32 %v2921, 4294901760
    %2923 = vmatpush.msra.mxu0 %v2922
    %v2924 = vand.u32 %v2582, 4294901760
    %v2925 = vsub.f32 %v2582, %v2924
    %v2926 = vand.u32 %v2925, 4294901760
    %2927 = vmatpush.msra.mxu0 %v2926
    %v2928 = vand.u32 %v2579, 4294901760
    %v2929 = vsub.f32 %v2579, %v2928
    %v2930 = vand.u32 %v2929, 4294901760
    %2931 = vmatpush.msra.mxu0 %v2930
    %v2932 = vand.u32 %v2576, 4294901760
    %v2933 = vsub.f32 %v2576, %v2932
    %v2934 = vand.u32 %v2933, 4294901760
    %2935 = vmatpush.msra.mxu0 %v2934
    %v2936 = vand.u32 %v2594, 4294901760
    %2937 = vmatmul.f32.gmra.mxu0 %v2936
    %v2938 = vpop.f32.mrf.mxu0
    %v2939 = vadd.f32 %v2906, %v2938
    %2940 = vdwg.mxu0
    %2941 = vmatpush.msra.mxu0 0.0
    %2942 = vmatpush.msra.mxu0 0.0
    %2943 = vmatpush.msra.mxu0 0.0
    %2944 = vmatpush.msra.mxu0 0.0
    %2945 = vmatpush.msra.mxu0 0.0
    %2946 = vmatpush.msra.mxu0 0.0
    %2947 = vmatpush.msra.mxu0 0.0
    %2948 = vmatpush.msra.mxu0 0.0
    %2949 = vmatpush.msra.mxu0 0.0
    %2950 = vmatpush.msra.mxu0 0.0
    %2951 = vmatpush.msra.mxu0 0.0
    %2952 = vmatpush.msra.mxu0 0.0
    %v2953 = vand.u32 %v2585, 4294901760
    %2954 = vmatpush.msra.mxu0 %v2953
    %v2955 = vand.u32 %v2582, 4294901760
    %2956 = vmatpush.msra.mxu0 %v2955
    %v2957 = vand.u32 %v2579, 4294901760
    %2958 = vmatpush.msra.mxu0 %v2957
    %v2959 = vand.u32 %v2576, 4294901760
    %2960 = vmatpush.msra.mxu0 %v2959
    %v2961 = vand.u32 %v2594, 4294901760
    %2962 = vmatmul.f32.gmra.mxu0 %v2961
    %v2963 = vpop.f32.mrf.mxu0
    %v2964 = vadd.f32 %v2939, %v2963
    %2965 = vdwg.mxu0
    %2966 = vmatpush.msra.mxu0 0.0
    %2967 = vmatpush.msra.mxu0 0.0
    %2968 = vmatpush.msra.mxu0 0.0
    %2969 = vmatpush.msra.mxu0 0.0
    %2970 = vmatpush.msra.mxu0 0.0
    %2971 = vmatpush.msra.mxu0 0.0
    %2972 = vmatpush.msra.mxu0 0.0
    %2973 = vmatpush.msra.mxu0 0.0
    %2974 = vmatpush.msra.mxu0 0.0
    %2975 = vmatpush.msra.mxu0 0.0
    %2976 = vmatpush.msra.mxu0 0.0
    %2977 = vmatpush.msra.mxu0 0.0
    %v2978 = vand.u32 %v2586, 4294901760
    %2979 = vmatpush.msra.mxu0 %v2978
    %v2980 = vand.u32 %v2583, 4294901760
    %2981 = vmatpush.msra.mxu0 %v2980
    %v2982 = vand.u32 %v2580, 4294901760
    %2983 = vmatpush.msra.mxu0 %v2982
    %v2984 = vand.u32 %v2577, 4294901760
    %2985 = vmatpush.msra.mxu0 %v2984
    %v2986 = vand.u32 %v2594, 4294901760
    %v2987 = vsub.f32 %v2594, %v2986
    %v2988 = vand.u32 %v2987, 4294901760
    %v2989 = vsub.f32 %v2987, %v2988
    %v2990 = vand.u32 %v2989, 4294901760
    %2991 = vmatmul.f32.gmra.mxu0 %v2990
    %v2992 = vpop.f32.mrf.mxu0
    %v2993 = vadd.f32 %v2593, %v2992
    %2994 = vdwg.mxu0
    %2995 = vmatpush.msra.mxu0 0.0
    %2996 = vmatpush.msra.mxu0 0.0
    %2997 = vmatpush.msra.mxu0 0.0
    %2998 = vmatpush.msra.mxu0 0.0
    %2999 = vmatpush.msra.mxu0 0.0
    %3000 = vmatpush.msra.mxu0 0.0
    %3001 = vmatpush.msra.mxu0 0.0
    %3002 = vmatpush.msra.mxu0 0.0
    %3003 = vmatpush.msra.mxu0 0.0
    %3004 = vmatpush.msra.mxu0 0.0
    %3005 = vmatpush.msra.mxu0 0.0
    %3006 = vmatpush.msra.mxu0 0.0
    %v3007 = vand.u32 %v2586, 4294901760
    %v3008 = vsub.f32 %v2586, %v3007
    %v3009 = vand.u32 %v3008, 4294901760
    %v3010 = vsub.f32 %v3008, %v3009
    %v3011 = vand.u32 %v3010, 4294901760
    %3012 = vmatpush.msra.mxu0 %v3011
    %v3013 = vand.u32 %v2583, 4294901760
    %v3014 = vsub.f32 %v2583, %v3013
    %v3015 = vand.u32 %v3014, 4294901760
    %v3016 = vsub.f32 %v3014, %v3015
    %v3017 = vand.u32 %v3016, 4294901760
    %3018 = vmatpush.msra.mxu0 %v3017
    %v3019 = vand.u32 %v2580, 4294901760
    %v3020 = vsub.f32 %v2580, %v3019
    %v3021 = vand.u32 %v3020, 4294901760
    %v3022 = vsub.f32 %v3020, %v3021
    %v3023 = vand.u32 %v3022, 4294901760
    %3024 = vmatpush.msra.mxu0 %v3023
    %v3025 = vand.u32 %v2577, 4294901760
    %v3026 = vsub.f32 %v2577, %v3025
    %v3027 = vand.u32 %v3026, 4294901760
    %v3028 = vsub.f32 %v3026, %v3027
    %v3029 = vand.u32 %v3028, 4294901760
    %3030 = vmatpush.msra.mxu0 %v3029
    %v3031 = vand.u32 %v2594, 4294901760
    %3032 = vmatmul.f32.gmra.mxu0 %v3031
    %v3033 = vpop.f32.mrf.mxu0
    %v3034 = vadd.f32 %v2993, %v3033
    %3035 = vdwg.mxu0
    %3036 = vmatpush.msra.mxu0 0.0
    %3037 = vmatpush.msra.mxu0 0.0
    %3038 = vmatpush.msra.mxu0 0.0
    %3039 = vmatpush.msra.mxu0 0.0
    %3040 = vmatpush.msra.mxu0 0.0
    %3041 = vmatpush.msra.mxu0 0.0
    %3042 = vmatpush.msra.mxu0 0.0
    %3043 = vmatpush.msra.mxu0 0.0
    %3044 = vmatpush.msra.mxu0 0.0
    %3045 = vmatpush.msra.mxu0 0.0
    %3046 = vmatpush.msra.mxu0 0.0
    %3047 = vmatpush.msra.mxu0 0.0
    %v3048 = vand.u32 %v2586, 4294901760
    %v3049 = vsub.f32 %v2586, %v3048
    %3050 = vmatpush.msra.mxu0 %v3049
    %v3051 = vand.u32 %v2583, 4294901760
    %v3052 = vsub.f32 %v2583, %v3051
    %3053 = vmatpush.msra.mxu0 %v3052
    %v3054 = vand.u32 %v2580, 4294901760
    %v3055 = vsub.f32 %v2580, %v3054
    %3056 = vmatpush.msra.mxu0 %v3055
    %v3057 = vand.u32 %v2577, 4294901760
    %v3058 = vsub.f32 %v2577, %v3057
    %3059 = vmatpush.msra.mxu0 %v3058
    %v3060 = vand.u32 %v2594, 4294901760
    %v3061 = vsub.f32 %v2594, %v3060
    %3062 = vmatmul.f32.gmra.mxu0 %v3061
    %v3063 = vpop.f32.mrf.mxu0
    %v3064 = vadd.f32 %v3034, %v3063
    %3065 = vdwg.mxu0
    %3066 = vmatpush.msra.mxu0 0.0
    %3067 = vmatpush.msra.mxu0 0.0
    %3068 = vmatpush.msra.mxu0 0.0
    %3069 = vmatpush.msra.mxu0 0.0
    %3070 = vmatpush.msra.mxu0 0.0
    %3071 = vmatpush.msra.mxu0 0.0
    %3072 = vmatpush.msra.mxu0 0.0
    %3073 = vmatpush.msra.mxu0 0.0
    %3074 = vmatpush.msra.mxu0 0.0
    %3075 = vmatpush.msra.mxu0 0.0
    %3076 = vmatpush.msra.mxu0 0.0
    %3077 = vmatpush.msra.mxu0 0.0
    %v3078 = vand.u32 %v2586, 4294901760
    %3079 = vmatpush.msra.mxu0 %v3078
    %v3080 = vand.u32 %v2583, 4294901760
    %3081 = vmatpush.msra.mxu0 %v3080
    %v3082 = vand.u32 %v2580, 4294901760
    %3083 = vmatpush.msra.mxu0 %v3082
    %v3084 = vand.u32 %v2577, 4294901760
    %3085 = vmatpush.msra.mxu0 %v3084
    %v3086 = vand.u32 %v2594, 4294901760
    %v3087 = vsub.f32 %v2594, %v3086
    %v3088 = vand.u32 %v3087, 4294901760
    %3089 = vmatmul.f32.gmra.mxu0 %v3088
    %v3090 = vpop.f32.mrf.mxu0
    %v3091 = vadd.f32 %v3064, %v3090
    %3092 = vdwg.mxu0
    %3093 = vmatpush.msra.mxu0 0.0
    %3094 = vmatpush.msra.mxu0 0.0
    %3095 = vmatpush.msra.mxu0 0.0
    %3096 = vmatpush.msra.mxu0 0.0
    %3097 = vmatpush.msra.mxu0 0.0
    %3098 = vmatpush.msra.mxu0 0.0
    %3099 = vmatpush.msra.mxu0 0.0
    %3100 = vmatpush.msra.mxu0 0.0
    %3101 = vmatpush.msra.mxu0 0.0
    %3102 = vmatpush.msra.mxu0 0.0
    %3103 = vmatpush.msra.mxu0 0.0
    %3104 = vmatpush.msra.mxu0 0.0
    %v3105 = vand.u32 %v2586, 4294901760
    %v3106 = vsub.f32 %v2586, %v3105
    %v3107 = vand.u32 %v3106, 4294901760
    %3108 = vmatpush.msra.mxu0 %v3107
    %v3109 = vand.u32 %v2583, 4294901760
    %v3110 = vsub.f32 %v2583, %v3109
    %v3111 = vand.u32 %v3110, 4294901760
    %3112 = vmatpush.msra.mxu0 %v3111
    %v3113 = vand.u32 %v2580, 4294901760
    %v3114 = vsub.f32 %v2580, %v3113
    %v3115 = vand.u32 %v3114, 4294901760
    %3116 = vmatpush.msra.mxu0 %v3115
    %v3117 = vand.u32 %v2577, 4294901760
    %v3118 = vsub.f32 %v2577, %v3117
    %v3119 = vand.u32 %v3118, 4294901760
    %3120 = vmatpush.msra.mxu0 %v3119
    %v3121 = vand.u32 %v2594, 4294901760
    %3122 = vmatmul.f32.gmra.mxu0 %v3121
    %v3123 = vpop.f32.mrf.mxu0
    %v3124 = vadd.f32 %v3091, %v3123
    %3125 = vdwg.mxu0
    %3126 = vmatpush.msra.mxu0 0.0
    %3127 = vmatpush.msra.mxu0 0.0
    %3128 = vmatpush.msra.mxu0 0.0
    %3129 = vmatpush.msra.mxu0 0.0
    %3130 = vmatpush.msra.mxu0 0.0
    %3131 = vmatpush.msra.mxu0 0.0
    %3132 = vmatpush.msra.mxu0 0.0
    %3133 = vmatpush.msra.mxu0 0.0
    %3134 = vmatpush.msra.mxu0 0.0
    %3135 = vmatpush.msra.mxu0 0.0
    %3136 = vmatpush.msra.mxu0 0.0
    %3137 = vmatpush.msra.mxu0 0.0
    %v3138 = vand.u32 %v2586, 4294901760
    %3139 = vmatpush.msra.mxu0 %v3138
    %v3140 = vand.u32 %v2583, 4294901760
    %3141 = vmatpush.msra.mxu0 %v3140
    %v3142 = vand.u32 %v2580, 4294901760
    %3143 = vmatpush.msra.mxu0 %v3142
    %v3144 = vand.u32 %v2577, 4294901760
    %3145 = vmatpush.msra.mxu0 %v3144
    %v3146 = vand.u32 %v2594, 4294901760
    %3147 = vmatmul.f32.gmra.mxu0 %v3146
    %v3148 = vpop.f32.mrf.mxu0
    %v3149 = vadd.f32 %v3124, %v3148
    %3150 = vdwg.mxu0
    %v3154 = vrot.slane %v2964, 7
    %v3155 = vrot.slane %v3149, 6
    %vm3156 = vcmask 1040384
    %v3157 = vsel %vm3156, %v2779, %v3154
    %vm3158 = vcmask 1041408
    %v3159 = vsel %vm3158, %v3157, %v3155
    %v3161 = vlaneseq
    %vm3162 = vcmp.ge.s32.totalorder %v3161, 0
    %vm3163 = vcmp.lt.s32.totalorder %v3161, 384
    %vm3164 = vmand %vm3162, %vm3163
    %3165 = vst.msk [vmem:[#allocation7] sm:$0x7] %vm3164, %v3159
    // Predicated region
    $region30: #{tpu_custom_call.1} parent=1 // pred_check
      _
    $region31: #{tpu_custom_call.1} parent=1 // pred_check_branch
      %3167 = sbr.rel (0) target = $region33
    $region32: #{tpu_custom_call.1} parent=1 // pred_region
      %3169 = vsyncadd [#allocation4], 0
      %s3171 = sshll.u32 [#allocation7], 4
      %s3172 = int_to_ptr.vmem [resolvable:$true] %s3171
      %s3173 = sshll.u32 %s5, 4
      %s3174 = int_to_ptr.hbm [resolvable:$true] %s3173
      %3176 = dma.vmem_to_hbm [thread:$0]  %s3172, 48, %s3174, [#allocation4]
    $region33: #{tpu_custom_call.1} parent=1 // pred_fallthru
      _
    // Predicated region
    $region34: #{tpu_custom_call.1} parent=1 // pred_check
      _
    $region35: #{tpu_custom_call.1} parent=1 // pred_check_branch
      %3178 = sbr.rel (0) target = $region37
    $region36: #{tpu_custom_call.1} parent=1 // pred_region
      %3180 = dma.done [#allocation4], 48
    $region37: #{tpu_custom_call.1} parent=1 // pred_fallthru
      _
    %3181 = vsyncpa [#allocation3], 1
    %3182 = vsyncpa [#allocation6], 1
    %3183 = vsyncpa [#allocation4], 1

</llo_original>
